<compile_context>
chip_gen: v6e
topology: v6e:2x2x1
jax: 0.10.0
libtpu: 0.0.40
codegen_flags: <defaults>
</compile_context>

<pallas_src>
import functools

import jax
import jax.numpy as jnp
import numpy as np
from jax.experimental import pallas as pl
from jax.experimental.pallas import tpu as pltpu


# ----------------------------- fused Pallas kernel -------------------------- #

def _decoder_kernel(n_layers, batch, hid_dim,
                    ids_ref, hid_ref, cell_ref, emb_hbm, *refs):
    """Fused forward: HBM embedding DMA-gather -> n_layers LSTM cells -> linear.

    ids_ref : [B]         int32, SMEM   (token ids, pre-clamped)
    hid_ref : [L, B, H]   f32,   VMEM
    cell_ref: [L, B, H]   f32,   VMEM
    emb_hbm : [V, E]      f32,   HBM    (gathered row-by-row via DMA)
    refs    : per layer l: w_ih_t [in_dim, 4H] bf16, w_hh_t [H, 4H] bf16, b [1, 4H] f32
              then out_w_t [H, V] bf16, out_b [1, V] f32
              outputs: pred [B, V] f32, h_out [L, B, H] f32, c_out [L, B, H] f32
              scratch: x_vmem [B, E] f32, dma_sem DMA((B,))
    """
    lstm_refs = refs[:3 * n_layers]
    out_w_ref = refs[3 * n_layers]
    out_b_ref = refs[3 * n_layers + 1]
    pred_ref = refs[3 * n_layers + 2]
    h_out_ref = refs[3 * n_layers + 3]
    c_out_ref = refs[3 * n_layers + 4]
    x_vmem = refs[3 * n_layers + 5]
    dma_sem = refs[3 * n_layers + 6]
    H = hid_dim

    # --- Embedding gather: DMA only the B needed rows HBM -> VMEM scratch. ---
    copies = []
    for b in range(batch):
        cp = pltpu.make_async_copy(
            emb_hbm.at[pl.ds(ids_ref[b], 1), :],   # [1, E] row in HBM
            x_vmem.at[pl.ds(b, 1), :],             # [1, E] row in VMEM scratch
            dma_sem.at[b])
        cp.start()
        copies.append(cp)
    for cp in copies:
        cp.wait()

    # Eval-mode dropout on the embedding is identity; cast to bf16 for the MXU.
    x = x_vmem[...].astype(jnp.bfloat16)            # [B, E]

    for layer in range(n_layers):
        w_ih_ref = lstm_refs[3 * layer]             # [in_dim, 4H] bf16
        w_hh_ref = lstm_refs[3 * layer + 1]         # [H, 4H]      bf16
        b_ref = lstm_refs[3 * layer + 2]            # [1, 4H]      f32
        h_prev = hid_ref[layer]                     # [B, H]       f32
        c_prev = cell_ref[layer]                    # [B, H]       f32

        # Two small MXU dots (no lane-axis concat), f32 accumulation.
        gates = (jnp.dot(x, w_ih_ref[...], preferred_element_type=jnp.float32)
                 + jnp.dot(h_prev.astype(jnp.bfloat16), w_hh_ref[...],
                           preferred_element_type=jnp.float32)
                 + b_ref[...])                      # [B, 4H] f32

        # One full-vreg sigmoid pass + one tanh pass, then static gate slices
        # (gate order i, f, g, o as in nn.LSTM).
        sig = jax.nn.sigmoid(gates)
        th = jnp.tanh(gates)
        i = sig[:, 0 * H:1 * H]
        f = sig[:, 1 * H:2 * H]
        g = th[:, 2 * H:3 * H]
        o = sig[:, 3 * H:4 * H]

        c_new = f * c_prev + i * g
        h_new = o * jnp.tanh(c_new)

        h_out_ref[layer] = h_new
        c_out_ref[layer] = c_new
        x = h_new.astype(jnp.bfloat16)              # inter-layer dropout: identity (eval)

    # Output projection: prediction = h_top @ W_out^T + b_out.
    pred_ref[...] = (jnp.dot(x, out_w_ref[...], preferred_element_type=jnp.float32)
                     + out_b_ref[...])


def _fused_decoder_call(token_ids, hidden, cell, embedding, lstm_flat, out_w_t, out_b):
    n_layers, B, H = hidden.shape
    V, E = embedding.shape
    kernel = functools.partial(_decoder_kernel, n_layers, B, H)

    vmem = pl.BlockSpec(memory_space=pltpu.MemorySpace.VMEM)
    smem = pl.BlockSpec(memory_space=pltpu.MemorySpace.SMEM)
    hbm = pl.BlockSpec(memory_space=pl.ANY)          # embedding stays in HBM

    return pl.pallas_call(
        kernel,
        out_shape=(
            jax.ShapeDtypeStruct((B, V), jnp.float32),            # prediction
            jax.ShapeDtypeStruct((n_layers, B, H), jnp.float32),  # new hidden
            jax.ShapeDtypeStruct((n_layers, B, H), jnp.float32),  # new cell
        ),
        in_specs=[smem, vmem, vmem, hbm] + [vmem] * (len(lstm_flat) + 2),
        out_specs=(vmem, vmem, vmem),
        scratch_shapes=[
            pltpu.VMEM((B, E), embedding.dtype),      # gathered embedding rows
            pltpu.SemaphoreType.DMA((B,)),            # one DMA sem per row
        ],
        # hidden -> new hidden, cell -> new cell reuse the same HBM buffers.
        input_output_aliases={1: 1, 2: 2},
    )(token_ids, hidden, cell, embedding, *lstm_flat, out_w_t, out_b)


# --------------------------- module construction --------------------------- #

def init_decoder_params(key, output_dim, emb_dim, hid_dim, n_layers):
    """Synthetic parameters in the original nn.Embedding/nn.LSTM/nn.Linear layout.

    Matmul weights are stored in bf16 (decode is weight-bandwidth bound); biases stay
    f32. On v7x sub-bf16 weights should be fp8 (no int MXU path); int8 is fine on
    v5e/v6e -- not done at these toy sizes.
    """
    keys = jax.random.split(key, 2 + 4 * n_layers + 2)
    ki = iter(keys)
    params = {}
    params["embedding"] = jax.random.normal(next(ki), (output_dim, emb_dim),
                                            jnp.float32) * 0.1            # f32 (HBM row gather)
    lstm = []
    for layer in range(n_layers):
        in_dim = emb_dim if layer == 0 else hid_dim
        w_ih = (jax.random.normal(next(ki), (4 * hid_dim, in_dim), jnp.float32) * 0.1
                ).astype(jnp.bfloat16)
        w_hh = (jax.random.normal(next(ki), (4 * hid_dim, hid_dim), jnp.float32) * 0.1
                ).astype(jnp.bfloat16)
        b_ih = jax.random.normal(next(ki), (4 * hid_dim,), jnp.float32) * 0.1
        b_hh = jax.random.normal(next(ki), (4 * hid_dim,), jnp.float32) * 0.1
        lstm.append({"w_ih": w_ih, "w_hh": w_hh, "b_ih": b_ih, "b_hh": b_hh})
    params["lstm"] = lstm
    params["w_out"] = (jax.random.normal(next(ki), (output_dim, hid_dim), jnp.float32) * 0.1
                       ).astype(jnp.bfloat16)
    params["b_out"] = jax.random.normal(next(ki), (output_dim,), jnp.float32) * 0.1
    return params


def prepare_kernel_params(params):
    """Kernel-layout parameters: pre-transposed bf16 weights, folded f32 biases."""
    kp = {"embedding": params["embedding"]}
    lstm_flat = []
    for lp in params["lstm"]:
        lstm_flat += [
            lp["w_ih"].T,                                               # [in_dim, 4H] bf16
            lp["w_hh"].T,                                               # [H, 4H]      bf16
            (lp["b_ih"] + lp["b_hh"]).reshape(1, -1).astype(jnp.float32),
        ]
    kp["lstm_flat"] = tuple(lstm_flat)
    kp["out_w_t"] = params["w_out"].T                                   # [H, V] bf16
    kp["out_b"] = params["b_out"].reshape(1, -1)
    return kp


@functools.partial(jax.jit, donate_argnums=(2, 3))
def decoder_forward(kparams, token_ids, hidden, cell):
    """Forward of DecoderBaseline (eval mode).

    token_ids: [B] int32
    hidden   : [n_layers, B, H] float32   (donated; updated in place via aliasing)
    cell     : [n_layers, B, H] float32   (donated; updated in place via aliasing)
    returns (prediction [B, V], hidden, cell)
    """
    V = kparams["embedding"].shape[0]
    # Clamp ids (nn.Embedding / jnp.take-style safety) so the HBM DMA never goes OOB.
    token_ids = jnp.clip(token_ids, 0, V - 1).astype(jnp.int32)
    return _fused_decoder_call(token_ids, hidden, cell, kparams["embedding"],
                               list(kparams["lstm_flat"]),
                               kparams["out_w_t"], kparams["out_b"])


# ------------------------------- reference --------------------------------- #

def decoder_forward_ref(params, token_ids, hidden, cell):
    """Pure-JAX reference built from the original PyTorch-layout parameters."""
    x = jnp.take(params["embedding"], token_ids, axis=0).astype(jnp.bfloat16)
    H = hidden.shape[-1]
    new_h, new_c = [], []
    for layer, lp in enumerate(params["lstm"]):
        gates = (jnp.dot(x, lp["w_ih"].T, preferred_element_type=jnp.float32)
                 + jnp.dot(hidden[layer].astype(jnp.bfloat16), lp["w_hh"].T,
                           preferred_element_type=jnp.float32)
                 + lp["b_ih"] + lp["b_hh"])
        i = jax.nn.sigmoid(gates[:, 0 * H:1 * H])
        f = jax.nn.sigmoid(gates[:, 1 * H:2 * H])
        g = jnp.tanh(gates[:, 2 * H:3 * H])
        o = jax.nn.sigmoid(gates[:, 3 * H:4 * H])
        c_l = f * cell[layer] + i * g
        h_l = o * jnp.tanh(c_l)
        new_h.append(h_l)
        new_c.append(c_l)
        x = h_l.astype(jnp.bfloat16)
    pred = (jnp.dot(x, params["w_out"].T, preferred_element_type=jnp.float32)
            + params["b_out"])
    return pred, jnp.stack(new_h, 0), jnp.stack(new_c, 0)


# --------------------------------- main ------------------------------------ #

if __name__ == "__main__":
    OUTPUT_DIM = 128   # vocab size
    EMB_DIM = 32
    HID_DIM = 32
    N_LAYERS = 2
    BATCH = 8

    key = jax.random.PRNGKey(0)
    k_par, k_tok, k_h, k_c = jax.random.split(key, 4)

    params = init_decoder_params(k_par, OUTPUT_DIM, EMB_DIM, HID_DIM, N_LAYERS)
    kparams = prepare_kernel_params(params)
    token_ids = jax.random.randint(k_tok, (BATCH,), 0, OUTPUT_DIM, dtype=jnp.int32)
    hidden = jax.random.normal(k_h, (N_LAYERS, BATCH, HID_DIM), jnp.float32)
    cell = jax.random.normal(k_c, (N_LAYERS, BATCH, HID_DIM), jnp.float32)

    # Reference first: hidden/cell are donated to the kernel call below.
    pred_r, h_r, c_r = decoder_forward_ref(params, token_ids, hidden, cell)
    pred_r, h_r, c_r = jax.block_until_ready((pred_r, h_r, c_r))

    pred, h_new, c_new = decoder_forward(kparams, token_ids, hidden, cell)
    jax.block_until_ready((pred, h_new, c_new))

    np.testing.assert_allclose(np.asarray(pred), np.asarray(pred_r), atol=2e-2, rtol=2e-2)
    np.testing.assert_allclose(np.asarray(h_new), np.asarray(h_r), atol=2e-2, rtol=2e-2)
    np.testing.assert_allclose(np.asarray(c_new), np.asarray(c_r), atol=2e-2, rtol=2e-2)

    assert pred.shape == (BATCH, OUTPUT_DIM)
    assert h_new.shape == (N_LAYERS, BATCH, HID_DIM)
    assert c_new.shape == (N_LAYERS, BATCH, HID_DIM)

    print("KERNEL_OK")
</pallas_src>

<mosaic_0001>
module attributes {stable_mosaic.version = 11 : i64} {
  func.func @_decoder_kernel(%arg0: memref<8xi32, #tpu.memory_space<smem>>, %arg1: memref<2x8x32xf32, #tpu.memory_space<vmem>>, %arg2: memref<2x8x32xf32, #tpu.memory_space<vmem>>, %arg3: memref<128x32xf32, #tpu.memory_space<any>>, %arg4: memref<32x128xbf16, #tpu.memory_space<vmem>>, %arg5: memref<32x128xbf16, #tpu.memory_space<vmem>>, %arg6: memref<1x128xf32, #tpu.memory_space<vmem>>, %arg7: memref<32x128xbf16, #tpu.memory_space<vmem>>, %arg8: memref<32x128xbf16, #tpu.memory_space<vmem>>, %arg9: memref<1x128xf32, #tpu.memory_space<vmem>>, %arg10: memref<32x128xbf16, #tpu.memory_space<vmem>>, %arg11: memref<1x128xf32, #tpu.memory_space<vmem>>, %arg12: memref<8x128xf32, #tpu.memory_space<vmem>>, %arg13: memref<2x8x32xf32, #tpu.memory_space<vmem>>, %arg14: memref<2x8x32xf32, #tpu.memory_space<vmem>>, %arg15: memref<8x32xf32, #tpu.memory_space<vmem>>, %arg16: memref<8x!tpu.dma_semaphore, #tpu.memory_space<semaphore_mem>>) attributes {dimension_semantics = [], scalar_prefetch = 0 : i64, scratch_operands = 2 : i64, tpu.core_type = #tpu.core_type<tc>} {
    %c0 = arith.constant 0 : index
    %0 = memref.load %arg0[%c0] : memref<8xi32, #tpu.memory_space<smem>>
    %c0_i32 = arith.constant 0 : i32
    %c0_i32_0 = arith.constant 0 : i32
    %1 = tpu.memref_slice %arg3[%0, %c0_i32_0] : memref<128x32xf32, #tpu.memory_space<any>> -> memref<1x32xf32, #tpu.memory_space<any>>
    %c0_i32_1 = arith.constant 0 : i32
    %c0_i32_2 = arith.constant 0 : i32
    %2 = tpu.memref_slice %arg15[%c0_i32_1, %c0_i32_2] : memref<8x32xf32, #tpu.memory_space<vmem>> -> memref<1x32xf32, #tpu.memory_space<vmem>>
    %3 = tpu.memref_slice %arg16[%c0_i32] : memref<8x!tpu.dma_semaphore, #tpu.memory_space<semaphore_mem>> -> memref<1x!tpu.dma_semaphore, #tpu.memory_space<semaphore_mem>>
    %4 = tpu.memref_squeeze %3 : memref<1x!tpu.dma_semaphore, #tpu.memory_space<semaphore_mem>> -> memref<!tpu.dma_semaphore, #tpu.memory_space<semaphore_mem>>
    tpu.enqueue_dma source(%1 : memref<1x32xf32, #tpu.memory_space<any>>) target(%2 : memref<1x32xf32, #tpu.memory_space<vmem>>) target_semaphore(%4 : memref<!tpu.dma_semaphore, #tpu.memory_space<semaphore_mem>>)
    %c1 = arith.constant 1 : index
    %5 = memref.load %arg0[%c1] : memref<8xi32, #tpu.memory_space<smem>>
    %c1_i32 = arith.constant 1 : i32
    %c0_i32_3 = arith.constant 0 : i32
    %6 = tpu.memref_slice %arg3[%5, %c0_i32_3] : memref<128x32xf32, #tpu.memory_space<any>> -> memref<1x32xf32, #tpu.memory_space<any>>
    %c1_i32_4 = arith.constant 1 : i32
    %c0_i32_5 = arith.constant 0 : i32
    %7 = tpu.memref_slice %arg15[%c1_i32_4, %c0_i32_5] : memref<8x32xf32, #tpu.memory_space<vmem>> -> memref<1x32xf32, #tpu.memory_space<vmem>>
    %8 = tpu.memref_slice %arg16[%c1_i32] : memref<8x!tpu.dma_semaphore, #tpu.memory_space<semaphore_mem>> -> memref<1x!tpu.dma_semaphore, #tpu.memory_space<semaphore_mem>>
    %9 = tpu.memref_squeeze %8 : memref<1x!tpu.dma_semaphore, #tpu.memory_space<semaphore_mem>> -> memref<!tpu.dma_semaphore, #tpu.memory_space<semaphore_mem>>
    tpu.enqueue_dma source(%6 : memref<1x32xf32, #tpu.memory_space<any>>) target(%7 : memref<1x32xf32, #tpu.memory_space<vmem>>) target_semaphore(%9 : memref<!tpu.dma_semaphore, #tpu.memory_space<semaphore_mem>>)
    %c2 = arith.constant 2 : index
    %10 = memref.load %arg0[%c2] : memref<8xi32, #tpu.memory_space<smem>>
    %c2_i32 = arith.constant 2 : i32
    %c0_i32_6 = arith.constant 0 : i32
    %11 = tpu.memref_slice %arg3[%10, %c0_i32_6] : memref<128x32xf32, #tpu.memory_space<any>> -> memref<1x32xf32, #tpu.memory_space<any>>
    %c2_i32_7 = arith.constant 2 : i32
    %c0_i32_8 = arith.constant 0 : i32
    %12 = tpu.memref_slice %arg15[%c2_i32_7, %c0_i32_8] : memref<8x32xf32, #tpu.memory_space<vmem>> -> memref<1x32xf32, #tpu.memory_space<vmem>>
    %13 = tpu.memref_slice %arg16[%c2_i32] : memref<8x!tpu.dma_semaphore, #tpu.memory_space<semaphore_mem>> -> memref<1x!tpu.dma_semaphore, #tpu.memory_space<semaphore_mem>>
    %14 = tpu.memref_squeeze %13 : memref<1x!tpu.dma_semaphore, #tpu.memory_space<semaphore_mem>> -> memref<!tpu.dma_semaphore, #tpu.memory_space<semaphore_mem>>
    tpu.enqueue_dma source(%11 : memref<1x32xf32, #tpu.memory_space<any>>) target(%12 : memref<1x32xf32, #tpu.memory_space<vmem>>) target_semaphore(%14 : memref<!tpu.dma_semaphore, #tpu.memory_space<semaphore_mem>>)
    %c3 = arith.constant 3 : index
    %15 = memref.load %arg0[%c3] : memref<8xi32, #tpu.memory_space<smem>>
    %c3_i32 = arith.constant 3 : i32
    %c0_i32_9 = arith.constant 0 : i32
    %16 = tpu.memref_slice %arg3[%15, %c0_i32_9] : memref<128x32xf32, #tpu.memory_space<any>> -> memref<1x32xf32, #tpu.memory_space<any>>
    %c3_i32_10 = arith.constant 3 : i32
    %c0_i32_11 = arith.constant 0 : i32
    %17 = tpu.memref_slice %arg15[%c3_i32_10, %c0_i32_11] : memref<8x32xf32, #tpu.memory_space<vmem>> -> memref<1x32xf32, #tpu.memory_space<vmem>>
    %18 = tpu.memref_slice %arg16[%c3_i32] : memref<8x!tpu.dma_semaphore, #tpu.memory_space<semaphore_mem>> -> memref<1x!tpu.dma_semaphore, #tpu.memory_space<semaphore_mem>>
    %19 = tpu.memref_squeeze %18 : memref<1x!tpu.dma_semaphore, #tpu.memory_space<semaphore_mem>> -> memref<!tpu.dma_semaphore, #tpu.memory_space<semaphore_mem>>
    tpu.enqueue_dma source(%16 : memref<1x32xf32, #tpu.memory_space<any>>) target(%17 : memref<1x32xf32, #tpu.memory_space<vmem>>) target_semaphore(%19 : memref<!tpu.dma_semaphore, #tpu.memory_space<semaphore_mem>>)
    %c4 = arith.constant 4 : index
    %20 = memref.load %arg0[%c4] : memref<8xi32, #tpu.memory_space<smem>>
    %c4_i32 = arith.constant 4 : i32
    %c0_i32_12 = arith.constant 0 : i32
    %21 = tpu.memref_slice %arg3[%20, %c0_i32_12] : memref<128x32xf32, #tpu.memory_space<any>> -> memref<1x32xf32, #tpu.memory_space<any>>
    %c4_i32_13 = arith.constant 4 : i32
    %c0_i32_14 = arith.constant 0 : i32
    %22 = tpu.memref_slice %arg15[%c4_i32_13, %c0_i32_14] : memref<8x32xf32, #tpu.memory_space<vmem>> -> memref<1x32xf32, #tpu.memory_space<vmem>>
    %23 = tpu.memref_slice %arg16[%c4_i32] : memref<8x!tpu.dma_semaphore, #tpu.memory_space<semaphore_mem>> -> memref<1x!tpu.dma_semaphore, #tpu.memory_space<semaphore_mem>>
    %24 = tpu.memref_squeeze %23 : memref<1x!tpu.dma_semaphore, #tpu.memory_space<semaphore_mem>> -> memref<!tpu.dma_semaphore, #tpu.memory_space<semaphore_mem>>
    tpu.enqueue_dma source(%21 : memref<1x32xf32, #tpu.memory_space<any>>) target(%22 : memref<1x32xf32, #tpu.memory_space<vmem>>) target_semaphore(%24 : memref<!tpu.dma_semaphore, #tpu.memory_space<semaphore_mem>>)
    %c5 = arith.constant 5 : index
    %25 = memref.load %arg0[%c5] : memref<8xi32, #tpu.memory_space<smem>>
    %c5_i32 = arith.constant 5 : i32
    %c0_i32_15 = arith.constant 0 : i32
    %26 = tpu.memref_slice %arg3[%25, %c0_i32_15] : memref<128x32xf32, #tpu.memory_space<any>> -> memref<1x32xf32, #tpu.memory_space<any>>
    %c5_i32_16 = arith.constant 5 : i32
    %c0_i32_17 = arith.constant 0 : i32
    %27 = tpu.memref_slice %arg15[%c5_i32_16, %c0_i32_17] : memref<8x32xf32, #tpu.memory_space<vmem>> -> memref<1x32xf32, #tpu.memory_space<vmem>>
    %28 = tpu.memref_slice %arg16[%c5_i32] : memref<8x!tpu.dma_semaphore, #tpu.memory_space<semaphore_mem>> -> memref<1x!tpu.dma_semaphore, #tpu.memory_space<semaphore_mem>>
    %29 = tpu.memref_squeeze %28 : memref<1x!tpu.dma_semaphore, #tpu.memory_space<semaphore_mem>> -> memref<!tpu.dma_semaphore, #tpu.memory_space<semaphore_mem>>
    tpu.enqueue_dma source(%26 : memref<1x32xf32, #tpu.memory_space<any>>) target(%27 : memref<1x32xf32, #tpu.memory_space<vmem>>) target_semaphore(%29 : memref<!tpu.dma_semaphore, #tpu.memory_space<semaphore_mem>>)
    %c6 = arith.constant 6 : index
    %30 = memref.load %arg0[%c6] : memref<8xi32, #tpu.memory_space<smem>>
    %c6_i32 = arith.constant 6 : i32
    %c0_i32_18 = arith.constant 0 : i32
    %31 = tpu.memref_slice %arg3[%30, %c0_i32_18] : memref<128x32xf32, #tpu.memory_space<any>> -> memref<1x32xf32, #tpu.memory_space<any>>
    %c6_i32_19 = arith.constant 6 : i32
    %c0_i32_20 = arith.constant 0 : i32
    %32 = tpu.memref_slice %arg15[%c6_i32_19, %c0_i32_20] : memref<8x32xf32, #tpu.memory_space<vmem>> -> memref<1x32xf32, #tpu.memory_space<vmem>>
    %33 = tpu.memref_slice %arg16[%c6_i32] : memref<8x!tpu.dma_semaphore, #tpu.memory_space<semaphore_mem>> -> memref<1x!tpu.dma_semaphore, #tpu.memory_space<semaphore_mem>>
    %34 = tpu.memref_squeeze %33 : memref<1x!tpu.dma_semaphore, #tpu.memory_space<semaphore_mem>> -> memref<!tpu.dma_semaphore, #tpu.memory_space<semaphore_mem>>
    tpu.enqueue_dma source(%31 : memref<1x32xf32, #tpu.memory_space<any>>) target(%32 : memref<1x32xf32, #tpu.memory_space<vmem>>) target_semaphore(%34 : memref<!tpu.dma_semaphore, #tpu.memory_space<semaphore_mem>>)
    %c7 = arith.constant 7 : index
    %35 = memref.load %arg0[%c7] : memref<8xi32, #tpu.memory_space<smem>>
    %c7_i32 = arith.constant 7 : i32
    %c0_i32_21 = arith.constant 0 : i32
    %36 = tpu.memref_slice %arg3[%35, %c0_i32_21] : memref<128x32xf32, #tpu.memory_space<any>> -> memref<1x32xf32, #tpu.memory_space<any>>
    %c7_i32_22 = arith.constant 7 : i32
    %c0_i32_23 = arith.constant 0 : i32
    %37 = tpu.memref_slice %arg15[%c7_i32_22, %c0_i32_23] : memref<8x32xf32, #tpu.memory_space<vmem>> -> memref<1x32xf32, #tpu.memory_space<vmem>>
    %38 = tpu.memref_slice %arg16[%c7_i32] : memref<8x!tpu.dma_semaphore, #tpu.memory_space<semaphore_mem>> -> memref<1x!tpu.dma_semaphore, #tpu.memory_space<semaphore_mem>>
    %39 = tpu.memref_squeeze %38 : memref<1x!tpu.dma_semaphore, #tpu.memory_space<semaphore_mem>> -> memref<!tpu.dma_semaphore, #tpu.memory_space<semaphore_mem>>
    tpu.enqueue_dma source(%36 : memref<1x32xf32, #tpu.memory_space<any>>) target(%37 : memref<1x32xf32, #tpu.memory_space<vmem>>) target_semaphore(%39 : memref<!tpu.dma_semaphore, #tpu.memory_space<semaphore_mem>>)
    %c0_i32_24 = arith.constant 0 : i32
    %c0_i32_25 = arith.constant 0 : i32
    %40 = tpu.memref_slice %arg3[%0, %c0_i32_25] : memref<128x32xf32, #tpu.memory_space<any>> -> memref<1x32xf32, #tpu.memory_space<any>>
    %c0_i32_26 = arith.constant 0 : i32
    %c0_i32_27 = arith.constant 0 : i32
    %41 = tpu.memref_slice %arg15[%c0_i32_26, %c0_i32_27] : memref<8x32xf32, #tpu.memory_space<vmem>> -> memref<1x32xf32, #tpu.memory_space<vmem>>
    %42 = tpu.memref_slice %arg16[%c0_i32_24] : memref<8x!tpu.dma_semaphore, #tpu.memory_space<semaphore_mem>> -> memref<1x!tpu.dma_semaphore, #tpu.memory_space<semaphore_mem>>
    %43 = tpu.memref_squeeze %42 : memref<1x!tpu.dma_semaphore, #tpu.memory_space<semaphore_mem>> -> memref<!tpu.dma_semaphore, #tpu.memory_space<semaphore_mem>>
    tpu.wait_dma2 semaphore(%43 : memref<!tpu.dma_semaphore, #tpu.memory_space<semaphore_mem>>) src(%40 : memref<1x32xf32, #tpu.memory_space<any>>) dst(%41 : memref<1x32xf32, #tpu.memory_space<vmem>>)
    %c1_i32_28 = arith.constant 1 : i32
    %c0_i32_29 = arith.constant 0 : i32
    %44 = tpu.memref_slice %arg3[%5, %c0_i32_29] : memref<128x32xf32, #tpu.memory_space<any>> -> memref<1x32xf32, #tpu.memory_space<any>>
    %c1_i32_30 = arith.constant 1 : i32
    %c0_i32_31 = arith.constant 0 : i32
    %45 = tpu.memref_slice %arg15[%c1_i32_30, %c0_i32_31] : memref<8x32xf32, #tpu.memory_space<vmem>> -> memref<1x32xf32, #tpu.memory_space<vmem>>
    %46 = tpu.memref_slice %arg16[%c1_i32_28] : memref<8x!tpu.dma_semaphore, #tpu.memory_space<semaphore_mem>> -> memref<1x!tpu.dma_semaphore, #tpu.memory_space<semaphore_mem>>
    %47 = tpu.memref_squeeze %46 : memref<1x!tpu.dma_semaphore, #tpu.memory_space<semaphore_mem>> -> memref<!tpu.dma_semaphore, #tpu.memory_space<semaphore_mem>>
    tpu.wait_dma2 semaphore(%47 : memref<!tpu.dma_semaphore, #tpu.memory_space<semaphore_mem>>) src(%44 : memref<1x32xf32, #tpu.memory_space<any>>) dst(%45 : memref<1x32xf32, #tpu.memory_space<vmem>>)
    %c2_i32_32 = arith.constant 2 : i32
    %c0_i32_33 = arith.constant 0 : i32
    %48 = tpu.memref_slice %arg3[%10, %c0_i32_33] : memref<128x32xf32, #tpu.memory_space<any>> -> memref<1x32xf32, #tpu.memory_space<any>>
    %c2_i32_34 = arith.constant 2 : i32
    %c0_i32_35 = arith.constant 0 : i32
    %49 = tpu.memref_slice %arg15[%c2_i32_34, %c0_i32_35] : memref<8x32xf32, #tpu.memory_space<vmem>> -> memref<1x32xf32, #tpu.memory_space<vmem>>
    %50 = tpu.memref_slice %arg16[%c2_i32_32] : memref<8x!tpu.dma_semaphore, #tpu.memory_space<semaphore_mem>> -> memref<1x!tpu.dma_semaphore, #tpu.memory_space<semaphore_mem>>
    %51 = tpu.memref_squeeze %50 : memref<1x!tpu.dma_semaphore, #tpu.memory_space<semaphore_mem>> -> memref<!tpu.dma_semaphore, #tpu.memory_space<semaphore_mem>>
    tpu.wait_dma2 semaphore(%51 : memref<!tpu.dma_semaphore, #tpu.memory_space<semaphore_mem>>) src(%48 : memref<1x32xf32, #tpu.memory_space<any>>) dst(%49 : memref<1x32xf32, #tpu.memory_space<vmem>>)
    %c3_i32_36 = arith.constant 3 : i32
    %c0_i32_37 = arith.constant 0 : i32
    %52 = tpu.memref_slice %arg3[%15, %c0_i32_37] : memref<128x32xf32, #tpu.memory_space<any>> -> memref<1x32xf32, #tpu.memory_space<any>>
    %c3_i32_38 = arith.constant 3 : i32
    %c0_i32_39 = arith.constant 0 : i32
    %53 = tpu.memref_slice %arg15[%c3_i32_38, %c0_i32_39] : memref<8x32xf32, #tpu.memory_space<vmem>> -> memref<1x32xf32, #tpu.memory_space<vmem>>
    %54 = tpu.memref_slice %arg16[%c3_i32_36] : memref<8x!tpu.dma_semaphore, #tpu.memory_space<semaphore_mem>> -> memref<1x!tpu.dma_semaphore, #tpu.memory_space<semaphore_mem>>
    %55 = tpu.memref_squeeze %54 : memref<1x!tpu.dma_semaphore, #tpu.memory_space<semaphore_mem>> -> memref<!tpu.dma_semaphore, #tpu.memory_space<semaphore_mem>>
    tpu.wait_dma2 semaphore(%55 : memref<!tpu.dma_semaphore, #tpu.memory_space<semaphore_mem>>) src(%52 : memref<1x32xf32, #tpu.memory_space<any>>) dst(%53 : memref<1x32xf32, #tpu.memory_space<vmem>>)
    %c4_i32_40 = arith.constant 4 : i32
    %c0_i32_41 = arith.constant 0 : i32
    %56 = tpu.memref_slice %arg3[%20, %c0_i32_41] : memref<128x32xf32, #tpu.memory_space<any>> -> memref<1x32xf32, #tpu.memory_space<any>>
    %c4_i32_42 = arith.constant 4 : i32
    %c0_i32_43 = arith.constant 0 : i32
    %57 = tpu.memref_slice %arg15[%c4_i32_42, %c0_i32_43] : memref<8x32xf32, #tpu.memory_space<vmem>> -> memref<1x32xf32, #tpu.memory_space<vmem>>
    %58 = tpu.memref_slice %arg16[%c4_i32_40] : memref<8x!tpu.dma_semaphore, #tpu.memory_space<semaphore_mem>> -> memref<1x!tpu.dma_semaphore, #tpu.memory_space<semaphore_mem>>
    %59 = tpu.memref_squeeze %58 : memref<1x!tpu.dma_semaphore, #tpu.memory_space<semaphore_mem>> -> memref<!tpu.dma_semaphore, #tpu.memory_space<semaphore_mem>>
    tpu.wait_dma2 semaphore(%59 : memref<!tpu.dma_semaphore, #tpu.memory_space<semaphore_mem>>) src(%56 : memref<1x32xf32, #tpu.memory_space<any>>) dst(%57 : memref<1x32xf32, #tpu.memory_space<vmem>>)
    %c5_i32_44 = arith.constant 5 : i32
    %c0_i32_45 = arith.constant 0 : i32
    %60 = tpu.memref_slice %arg3[%25, %c0_i32_45] : memref<128x32xf32, #tpu.memory_space<any>> -> memref<1x32xf32, #tpu.memory_space<any>>
    %c5_i32_46 = arith.constant 5 : i32
    %c0_i32_47 = arith.constant 0 : i32
    %61 = tpu.memref_slice %arg15[%c5_i32_46, %c0_i32_47] : memref<8x32xf32, #tpu.memory_space<vmem>> -> memref<1x32xf32, #tpu.memory_space<vmem>>
    %62 = tpu.memref_slice %arg16[%c5_i32_44] : memref<8x!tpu.dma_semaphore, #tpu.memory_space<semaphore_mem>> -> memref<1x!tpu.dma_semaphore, #tpu.memory_space<semaphore_mem>>
    %63 = tpu.memref_squeeze %62 : memref<1x!tpu.dma_semaphore, #tpu.memory_space<semaphore_mem>> -> memref<!tpu.dma_semaphore, #tpu.memory_space<semaphore_mem>>
    tpu.wait_dma2 semaphore(%63 : memref<!tpu.dma_semaphore, #tpu.memory_space<semaphore_mem>>) src(%60 : memref<1x32xf32, #tpu.memory_space<any>>) dst(%61 : memref<1x32xf32, #tpu.memory_space<vmem>>)
    %c6_i32_48 = arith.constant 6 : i32
    %c0_i32_49 = arith.constant 0 : i32
    %64 = tpu.memref_slice %arg3[%30, %c0_i32_49] : memref<128x32xf32, #tpu.memory_space<any>> -> memref<1x32xf32, #tpu.memory_space<any>>
    %c6_i32_50 = arith.constant 6 : i32
    %c0_i32_51 = arith.constant 0 : i32
    %65 = tpu.memref_slice %arg15[%c6_i32_50, %c0_i32_51] : memref<8x32xf32, #tpu.memory_space<vmem>> -> memref<1x32xf32, #tpu.memory_space<vmem>>
    %66 = tpu.memref_slice %arg16[%c6_i32_48] : memref<8x!tpu.dma_semaphore, #tpu.memory_space<semaphore_mem>> -> memref<1x!tpu.dma_semaphore, #tpu.memory_space<semaphore_mem>>
    %67 = tpu.memref_squeeze %66 : memref<1x!tpu.dma_semaphore, #tpu.memory_space<semaphore_mem>> -> memref<!tpu.dma_semaphore, #tpu.memory_space<semaphore_mem>>
    tpu.wait_dma2 semaphore(%67 : memref<!tpu.dma_semaphore, #tpu.memory_space<semaphore_mem>>) src(%64 : memref<1x32xf32, #tpu.memory_space<any>>) dst(%65 : memref<1x32xf32, #tpu.memory_space<vmem>>)
    %c7_i32_52 = arith.constant 7 : i32
    %c0_i32_53 = arith.constant 0 : i32
    %68 = tpu.memref_slice %arg3[%35, %c0_i32_53] : memref<128x32xf32, #tpu.memory_space<any>> -> memref<1x32xf32, #tpu.memory_space<any>>
    %c7_i32_54 = arith.constant 7 : i32
    %c0_i32_55 = arith.constant 0 : i32
    %69 = tpu.memref_slice %arg15[%c7_i32_54, %c0_i32_55] : memref<8x32xf32, #tpu.memory_space<vmem>> -> memref<1x32xf32, #tpu.memory_space<vmem>>
    %70 = tpu.memref_slice %arg16[%c7_i32_52] : memref<8x!tpu.dma_semaphore, #tpu.memory_space<semaphore_mem>> -> memref<1x!tpu.dma_semaphore, #tpu.memory_space<semaphore_mem>>
    %71 = tpu.memref_squeeze %70 : memref<1x!tpu.dma_semaphore, #tpu.memory_space<semaphore_mem>> -> memref<!tpu.dma_semaphore, #tpu.memory_space<semaphore_mem>>
    tpu.wait_dma2 semaphore(%71 : memref<!tpu.dma_semaphore, #tpu.memory_space<semaphore_mem>>) src(%68 : memref<1x32xf32, #tpu.memory_space<any>>) dst(%69 : memref<1x32xf32, #tpu.memory_space<vmem>>)
    %c0_56 = arith.constant 0 : index
    %c0_57 = arith.constant 0 : index
    %72 = vector.load %arg15[%c0_56, %c0_57] : memref<8x32xf32, #tpu.memory_space<vmem>>, vector<8x32xf32>
    %73 = arith.truncf %72 : vector<8x32xf32> to vector<8x32xbf16>
    %c0_58 = arith.constant 0 : index
    %c0_59 = arith.constant 0 : index
    %c0_60 = arith.constant 0 : index
    %74 = vector.load %arg1[%c0_58, %c0_59, %c0_60] : memref<2x8x32xf32, #tpu.memory_space<vmem>>, vector<1x8x32xf32>
    %75 = vector.shape_cast %74 : vector<1x8x32xf32> to vector<8x32xf32>
    %c0_61 = arith.constant 0 : index
    %c0_62 = arith.constant 0 : index
    %c0_63 = arith.constant 0 : index
    %76 = vector.load %arg2[%c0_61, %c0_62, %c0_63] : memref<2x8x32xf32, #tpu.memory_space<vmem>>, vector<1x8x32xf32>
    %77 = vector.shape_cast %76 : vector<1x8x32xf32> to vector<8x32xf32>
    %c0_64 = arith.constant 0 : index
    %c0_65 = arith.constant 0 : index
    %78 = vector.load %arg4[%c0_64, %c0_65] : memref<32x128xbf16, #tpu.memory_space<vmem>>, vector<32x128xbf16>
    %cst = arith.constant dense<0.000000e+00> : vector<8x128xf32>
    %79 = tpu.matmul %73, %78, %cst {dimension_numbers = #tpu.dot_dimension_numbers<[1], [0], [0], [1], [0, 0, 1, 1], [], []>} : vector<8x32xbf16>, vector<32x128xbf16>, vector<8x128xf32> -> vector<8x128xf32>
    %80 = arith.truncf %75 : vector<8x32xf32> to vector<8x32xbf16>
    %c0_66 = arith.constant 0 : index
    %c0_67 = arith.constant 0 : index
    %81 = vector.load %arg5[%c0_66, %c0_67] : memref<32x128xbf16, #tpu.memory_space<vmem>>, vector<32x128xbf16>
    %cst_68 = arith.constant dense<0.000000e+00> : vector<8x128xf32>
    %82 = tpu.matmul %80, %81, %cst_68 {dimension_numbers = #tpu.dot_dimension_numbers<[1], [0], [0], [1], [0, 0, 1, 1], [], []>} : vector<8x32xbf16>, vector<32x128xbf16>, vector<8x128xf32> -> vector<8x128xf32>
    %83 = arith.addf %79, %82 : vector<8x128xf32>
    %c0_69 = arith.constant 0 : index
    %c0_70 = arith.constant 0 : index
    %84 = vector.load %arg6[%c0_69, %c0_70] : memref<1x128xf32, #tpu.memory_space<vmem>>, vector<1x128xf32>
    %85 = vector.broadcast %84 : vector<1x128xf32> to vector<8x128xf32>
    %86 = arith.addf %83, %85 : vector<8x128xf32>
    %87 = arith.negf %86 : vector<8x128xf32>
    %88 = math.exp %87 : vector<8x128xf32>
    %cst_71 = arith.constant 1.000000e+00 : f32
    %89 = vector.broadcast %cst_71 : f32 to vector<8x128xf32>
    %90 = arith.addf %89, %88 : vector<8x128xf32>
    %91 = arith.divf %89, %90 : vector<8x128xf32>
    %92 = math.tanh %86 : vector<8x128xf32>
    %93 = vector.extract_strided_slice %91 {offsets = [0, 0], sizes = [8, 32], strides = [1, 1]} : vector<8x128xf32> to vector<8x32xf32>
    %94 = vector.extract_strided_slice %91 {offsets = [0, 32], sizes = [8, 32], strides = [1, 1]} : vector<8x128xf32> to vector<8x32xf32>
    %95 = vector.extract_strided_slice %92 {offsets = [0, 64], sizes = [8, 32], strides = [1, 1]} : vector<8x128xf32> to vector<8x32xf32>
    %96 = vector.extract_strided_slice %91 {offsets = [0, 96], sizes = [8, 32], strides = [1, 1]} : vector<8x128xf32> to vector<8x32xf32>
    %97 = arith.mulf %94, %77 : vector<8x32xf32>
    %98 = arith.mulf %93, %95 : vector<8x32xf32>
    %99 = arith.addf %97, %98 : vector<8x32xf32>
    %100 = math.tanh %99 : vector<8x32xf32>
    %101 = arith.mulf %96, %100 : vector<8x32xf32>
    %c0_72 = arith.constant 0 : index
    %c0_73 = arith.constant 0 : index
    %c0_74 = arith.constant 0 : index
    %102 = vector.load %arg13[%c0_72, %c0_73, %c0_74] : memref<2x8x32xf32, #tpu.memory_space<vmem>>, vector<1x8x32xf32>
    %103 = vector.shape_cast %102 : vector<1x8x32xf32> to vector<8x32xf32>
    %104 = vector.shape_cast %101 : vector<8x32xf32> to vector<1x8x32xf32>
    tpu.vector_store %arg13[%c0_72, %c0_73, %c0_74], %104 {strides = array<i32>} : memref<2x8x32xf32, #tpu.memory_space<vmem>>, vector<1x8x32xf32>,
    %c0_75 = arith.constant 0 : index
    %c0_76 = arith.constant 0 : index
    %c0_77 = arith.constant 0 : index
    %105 = vector.load %arg14[%c0_75, %c0_76, %c0_77] : memref<2x8x32xf32, #tpu.memory_space<vmem>>, vector<1x8x32xf32>
    %106 = vector.shape_cast %105 : vector<1x8x32xf32> to vector<8x32xf32>
    %107 = vector.shape_cast %99 : vector<8x32xf32> to vector<1x8x32xf32>
    tpu.vector_store %arg14[%c0_75, %c0_76, %c0_77], %107 {strides = array<i32>} : memref<2x8x32xf32, #tpu.memory_space<vmem>>, vector<1x8x32xf32>,
    %108 = arith.truncf %101 : vector<8x32xf32> to vector<8x32xbf16>
    %c1_78 = arith.constant 1 : index
    %c0_79 = arith.constant 0 : index
    %c0_80 = arith.constant 0 : index
    %109 = vector.load %arg1[%c1_78, %c0_79, %c0_80] : memref<2x8x32xf32, #tpu.memory_space<vmem>>, vector<1x8x32xf32>
    %110 = vector.shape_cast %109 : vector<1x8x32xf32> to vector<8x32xf32>
    %c1_81 = arith.constant 1 : index
    %c0_82 = arith.constant 0 : index
    %c0_83 = arith.constant 0 : index
    %111 = vector.load %arg2[%c1_81, %c0_82, %c0_83] : memref<2x8x32xf32, #tpu.memory_space<vmem>>, vector<1x8x32xf32>
    %112 = vector.shape_cast %111 : vector<1x8x32xf32> to vector<8x32xf32>
    %c0_84 = arith.constant 0 : index
    %c0_85 = arith.constant 0 : index
    %113 = vector.load %arg7[%c0_84, %c0_85] : memref<32x128xbf16, #tpu.memory_space<vmem>>, vector<32x128xbf16>
    %cst_86 = arith.constant dense<0.000000e+00> : vector<8x128xf32>
    %114 = tpu.matmul %108, %113, %cst_86 {dimension_numbers = #tpu.dot_dimension_numbers<[1], [0], [0], [1], [0, 0, 1, 1], [], []>} : vector<8x32xbf16>, vector<32x128xbf16>, vector<8x128xf32> -> vector<8x128xf32>
    %115 = arith.truncf %110 : vector<8x32xf32> to vector<8x32xbf16>
    %c0_87 = arith.constant 0 : index
    %c0_88 = arith.constant 0 : index
    %116 = vector.load %arg8[%c0_87, %c0_88] : memref<32x128xbf16, #tpu.memory_space<vmem>>, vector<32x128xbf16>
    %cst_89 = arith.constant dense<0.000000e+00> : vector<8x128xf32>
    %117 = tpu.matmul %115, %116, %cst_89 {dimension_numbers = #tpu.dot_dimension_numbers<[1], [0], [0], [1], [0, 0, 1, 1], [], []>} : vector<8x32xbf16>, vector<32x128xbf16>, vector<8x128xf32> -> vector<8x128xf32>
    %118 = arith.addf %114, %117 : vector<8x128xf32>
    %c0_90 = arith.constant 0 : index
    %c0_91 = arith.constant 0 : index
    %119 = vector.load %arg9[%c0_90, %c0_91] : memref<1x128xf32, #tpu.memory_space<vmem>>, vector<1x128xf32>
    %120 = vector.broadcast %119 : vector<1x128xf32> to vector<8x128xf32>
    %121 = arith.addf %118, %120 : vector<8x128xf32>
    %122 = arith.negf %121 : vector<8x128xf32>
    %123 = math.exp %122 : vector<8x128xf32>
    %cst_92 = arith.constant 1.000000e+00 : f32
    %124 = vector.broadcast %cst_92 : f32 to vector<8x128xf32>
    %125 = arith.addf %124, %123 : vector<8x128xf32>
    %126 = arith.divf %124, %125 : vector<8x128xf32>
    %127 = math.tanh %121 : vector<8x128xf32>
    %128 = vector.extract_strided_slice %126 {offsets = [0, 0], sizes = [8, 32], strides = [1, 1]} : vector<8x128xf32> to vector<8x32xf32>
    %129 = vector.extract_strided_slice %126 {offsets = [0, 32], sizes = [8, 32], strides = [1, 1]} : vector<8x128xf32> to vector<8x32xf32>
    %130 = vector.extract_strided_slice %127 {offsets = [0, 64], sizes = [8, 32], strides = [1, 1]} : vector<8x128xf32> to vector<8x32xf32>
    %131 = vector.extract_strided_slice %126 {offsets = [0, 96], sizes = [8, 32], strides = [1, 1]} : vector<8x128xf32> to vector<8x32xf32>
    %132 = arith.mulf %129, %112 : vector<8x32xf32>
    %133 = arith.mulf %128, %130 : vector<8x32xf32>
    %134 = arith.addf %132, %133 : vector<8x32xf32>
    %135 = math.tanh %134 : vector<8x32xf32>
    %136 = arith.mulf %131, %135 : vector<8x32xf32>
    %c1_93 = arith.constant 1 : index
    %c0_94 = arith.constant 0 : index
    %c0_95 = arith.constant 0 : index
    %137 = vector.load %arg13[%c1_93, %c0_94, %c0_95] : memref<2x8x32xf32, #tpu.memory_space<vmem>>, vector<1x8x32xf32>
    %138 = vector.shape_cast %137 : vector<1x8x32xf32> to vector<8x32xf32>
    %139 = vector.shape_cast %136 : vector<8x32xf32> to vector<1x8x32xf32>
    tpu.vector_store %arg13[%c1_93, %c0_94, %c0_95], %139 {strides = array<i32>} : memref<2x8x32xf32, #tpu.memory_space<vmem>>, vector<1x8x32xf32>,
    %c1_96 = arith.constant 1 : index
    %c0_97 = arith.constant 0 : index
    %c0_98 = arith.constant 0 : index
    %140 = vector.load %arg14[%c1_96, %c0_97, %c0_98] : memref<2x8x32xf32, #tpu.memory_space<vmem>>, vector<1x8x32xf32>
    %141 = vector.shape_cast %140 : vector<1x8x32xf32> to vector<8x32xf32>
    %142 = vector.shape_cast %134 : vector<8x32xf32> to vector<1x8x32xf32>
    tpu.vector_store %arg14[%c1_96, %c0_97, %c0_98], %142 {strides = array<i32>} : memref<2x8x32xf32, #tpu.memory_space<vmem>>, vector<1x8x32xf32>,
    %143 = arith.truncf %136 : vector<8x32xf32> to vector<8x32xbf16>
    %c0_99 = arith.constant 0 : index
    %c0_100 = arith.constant 0 : index
    %144 = vector.load %arg10[%c0_99, %c0_100] : memref<32x128xbf16, #tpu.memory_space<vmem>>, vector<32x128xbf16>
    %cst_101 = arith.constant dense<0.000000e+00> : vector<8x128xf32>
    %145 = tpu.matmul %143, %144, %cst_101 {dimension_numbers = #tpu.dot_dimension_numbers<[1], [0], [0], [1], [0, 0, 1, 1], [], []>} : vector<8x32xbf16>, vector<32x128xbf16>, vector<8x128xf32> -> vector<8x128xf32>
    %c0_102 = arith.constant 0 : index
    %c0_103 = arith.constant 0 : index
    %146 = vector.load %arg11[%c0_102, %c0_103] : memref<1x128xf32, #tpu.memory_space<vmem>>, vector<1x128xf32>
    %147 = vector.broadcast %146 : vector<1x128xf32> to vector<8x128xf32>
    %148 = arith.addf %145, %147 : vector<8x128xf32>
    %c0_104 = arith.constant 0 : index
    %c0_105 = arith.constant 0 : index
    %149 = vector.load %arg12[%c0_104, %c0_105] : memref<8x128xf32, #tpu.memory_space<vmem>>, vector<8x128xf32>
    tpu.vector_store %arg12[%c0_104, %c0_105], %148 {strides = array<i32>} : memref<8x128xf32, #tpu.memory_space<vmem>>, vector<8x128xf32>,
    return
  }
}

</mosaic_0001>

<llo_original>
// kernel: decoder_forward.1
$region0: #{decoder_forward.1}
  #allocation0 [shape = 'u32[]', space=smem, size = 0x4, offset = 0x4, fixed_abs, tag = 'smem constant byte address 0x4 - core index']
  #allocation1 [shape = 'u32[144,128]{1,0:T(1,128)}', space=vmem, size = 0x12000, scoped, tag = 'internal scratch']
  #allocation2 [shape = 'f32[8,32]{1,0:T(8,128)}', space=vmem, size = 0x1000, scoped, tag = 'scratch operand']
  #allocation3 [shape = 's32[8]{0}', space=sflag, size = 0x20, scoped, tag = 'scratch operand']
  #allocation15 [shape = 's32[]', space=sflag, size = 0x4, offset = 0, fixed_abs, tag = 'sflag constant byte address 0x0 - dummy sync flag']
  #allocation16 [shape = 's32[]', space=sflag, size = 0x4, offset = 0, fixed_abs, tag = 'sflag constant byte address 0x0 - dummy sync flag']
  #allocation17 [shape = 's32[]', space=sflag, size = 0x4, offset = 0, fixed_abs, tag = 'sflag constant byte address 0x0 - dummy sync flag']
  #allocation18 [shape = 's32[]', space=sflag, size = 0x4, offset = 0, fixed_abs, tag = 'sflag constant byte address 0x0 - dummy sync flag']
  #allocation19 [shape = 's32[]', space=sflag, size = 0x4, offset = 0, fixed_abs, tag = 'sflag constant byte address 0x0 - dummy sync flag']
  #allocation20 [shape = 's32[]', space=sflag, size = 0x4, offset = 0, fixed_abs, tag = 'sflag constant byte address 0x0 - dummy sync flag']
  #allocation21 [shape = 's32[]', space=sflag, size = 0x4, offset = 0, fixed_abs, tag = 'sflag constant byte address 0x0 - dummy sync flag']
  #allocation22 [shape = 's32[]', space=sflag, size = 0x4, offset = 0, fixed_abs, tag = 'sflag constant byte address 0x0 - dummy sync flag']
  %s0 = inlined_call_operand.vmem [shape: s32[8], index: 0, kind: input, shape index: {}]
  %s1 = inlined_call_operand.hbm [shape: f32[2,8,32], index: 1, kind: input, shape index: {}, may-alias: {1,13}]
  %s2 = inlined_call_operand.hbm [shape: f32[2,8,32], index: 2, kind: input, shape index: {}, may-alias: {2,14}]
  %s3 = inlined_call_operand.vmem [shape: f32[128,32], index: 3, kind: input, shape index: {}]
  %s4 = inlined_call_operand.vmem [shape: bf16[32,128], index: 4, kind: input, shape index: {}]
  %s5 = inlined_call_operand.vmem [shape: bf16[32,128], index: 5, kind: input, shape index: {}]
  %s6 = inlined_call_operand.vmem [shape: f32[1,128], index: 6, kind: input, shape index: {}]
  %s7 = inlined_call_operand.vmem [shape: bf16[32,128], index: 7, kind: input, shape index: {}]
  %s8 = inlined_call_operand.vmem [shape: bf16[32,128], index: 8, kind: input, shape index: {}]
  %s9 = inlined_call_operand.vmem [shape: f32[1,128], index: 9, kind: input, shape index: {}]
  %s10 = inlined_call_operand.vmem [shape: bf16[32,128], index: 10, kind: input, shape index: {}]
  %s11 = inlined_call_operand.vmem [shape: f32[1,128], index: 11, kind: input, shape index: {}]
  %s12 = inlined_call_operand.hbm [shape: f32[8,128], index: 12, kind: output, shape index: {0}]
  %s13 = inlined_call_operand.hbm [shape: f32[2,8,32], index: 13, kind: output, shape index: {1}, may-alias: {1,13}]
  %s14 = inlined_call_operand.hbm [shape: f32[2,8,32], index: 14, kind: output, shape index: {2}, may-alias: {2,14}]
  %15 = xla_tuple %s12, %s13, %s14
  %s16 = sld [smem:[#allocation0]]
  $region322: #{decoder_forward.1} parent=0
    _
  %s18 = ssub.s32 1, %s16
  %s19 = scalar_select 0, %s18, %s16
  $region1: #{decoder_forward.1} parent=0
    #allocation4 [shape = 'u8[512]{0}', space=smem, size = 0x200, scoped, tag = 'input window, operand 0, single buffered']
    #allocation5 [shape = 's32[1]{0}', space=sflag, size = 0x4, scoped, tag = 'scoped memory for decoder_forward.1']
    #allocation6 [shape = 's32[1]{0}', space=sflag, size = 0x4, scoped, tag = 'scoped memory for decoder_forward.1']
    #allocation7 [shape = 's32[1]{0}', space=sflag, size = 0x4, scoped, tag = 'scoped memory for decoder_forward.1']
    #allocation8 [shape = 'u8[8192]{0}', space=vmem, size = 0x2000, scoped, tag = 'input window, operand 1, single buffered']
    #allocation9 [shape = 'u8[8192]{0}', space=vmem, size = 0x2000, scoped, tag = 'input window, operand 2, single buffered']
    #allocation10 [shape = 's32[1]{0}', space=sflag, size = 0x4, scoped, tag = 'scoped memory for decoder_forward.1']
    #allocation11 [shape = 'u8[4096]{0}', space=vmem, size = 0x1000, scoped, tag = 'output window, operand 0, single buffered']
    #allocation12 [shape = 'u8[8192]{0}', space=vmem, size = 0x2000, scoped, tag = 'output window, operand 1, single buffered']
    #allocation13 [shape = 's32[1]{0}', space=sflag, size = 0x4, scoped, tag = 'scoped memory for decoder_forward.1']
    #allocation14 [shape = 'u8[8192]{0}', space=vmem, size = 0x2000, scoped, tag = 'output window, operand 2, single buffered']
    %20 = vsyncpa [#allocation7], 0
    %21 = vsyncpa [#allocation5], 0
    %22 = vsyncpa [#allocation10], 0
    %23 = vsyncpa [#allocation6], 0
    %24 = vsyncpa [#allocation13], 0
    // Predicated region
    $region2: #{decoder_forward.1} parent=1 // pred_check
      _
    $region3: #{decoder_forward.1} parent=1 // pred_check_branch
      %26 = sbr.rel (0) target = $region5
    $region4: #{decoder_forward.1} parent=1 // pred_region
      %s28 = ssub.s32 16, 16
      %29 = vsyncadd [#allocation7], %s28
      %s31 = sshll.u32 %s0, 4
      %s32 = int_to_ptr.vmem [resolvable:$true] %s31
      %34 = dma.vmem_to_smem %s32, 16, [#allocation4], [#allocation7]
    $region5: #{decoder_forward.1} parent=1 // pred_fallthru
      _
    // Predicated region
    $region6: #{decoder_forward.1} parent=1 // pred_check
      _
    $region7: #{decoder_forward.1} parent=1 // pred_check_branch
      %36 = sbr.rel (0) target = $region9
    $region8: #{decoder_forward.1} parent=1 // pred_region
      %s38 = ssub.s32 256, 256
      %39 = vsyncadd [#allocation5], %s38
      %s40 = sshll.u32 [#allocation8], 4
      %s41 = int_to_ptr.vmem [resolvable:$true] %s40
      %46 = dma.hbm_to_vmem [thread:$0]  %s1, 256, %s41, [#allocation5], 128, 128, 8
    $region9: #{decoder_forward.1} parent=1 // pred_fallthru
      _
    // Predicated region
    $region10: #{decoder_forward.1} parent=1 // pred_check
      _
    $region11: #{decoder_forward.1} parent=1 // pred_check_branch
      %48 = sbr.rel (0) target = $region13
    $region12: #{decoder_forward.1} parent=1 // pred_region
      %s50 = ssub.s32 256, 256
      %51 = vsyncadd [#allocation10], %s50
      %s52 = sshll.u32 [#allocation9], 4
      %s53 = int_to_ptr.vmem [resolvable:$true] %s52
      %58 = dma.hbm_to_vmem [thread:$0]  %s2, 256, %s53, [#allocation10], 128, 128, 8
    $region13: #{decoder_forward.1} parent=1 // pred_fallthru
      _
    // Predicated region
    $region14: #{decoder_forward.1} parent=1 // pred_check
      _
    $region15: #{decoder_forward.1} parent=1 // pred_check_branch
      %60 = sbr.rel (0) target = $region17
    $region16: #{decoder_forward.1} parent=1 // pred_region
      _
    $region17: #{decoder_forward.1} parent=1 // pred_fallthru
      _
    // Predicated region
    $region18: #{decoder_forward.1} parent=1 // pred_check
      _
    $region19: #{decoder_forward.1} parent=1 // pred_check_branch
      %62 = sbr.rel (0) target = $region21
    $region20: #{decoder_forward.1} parent=1 // pred_region
      _
    $region21: #{decoder_forward.1} parent=1 // pred_fallthru
      _
    // Predicated region
    $region22: #{decoder_forward.1} parent=1 // pred_check
      _
    $region23: #{decoder_forward.1} parent=1 // pred_check_branch
      %64 = sbr.rel (0) target = $region25
    $region24: #{decoder_forward.1} parent=1 // pred_region
      _
    $region25: #{decoder_forward.1} parent=1 // pred_fallthru
      _
    // Predicated region
    $region26: #{decoder_forward.1} parent=1 // pred_check
      _
    $region27: #{decoder_forward.1} parent=1 // pred_check_branch
      %66 = sbr.rel (0) target = $region29
    $region28: #{decoder_forward.1} parent=1 // pred_region
      _
    $region29: #{decoder_forward.1} parent=1 // pred_fallthru
      _
    // Predicated region
    $region30: #{decoder_forward.1} parent=1 // pred_check
      _
    $region31: #{decoder_forward.1} parent=1 // pred_check_branch
      %68 = sbr.rel (0) target = $region33
    $region32: #{decoder_forward.1} parent=1 // pred_region
      _
    $region33: #{decoder_forward.1} parent=1 // pred_fallthru
      _
    // Predicated region
    $region34: #{decoder_forward.1} parent=1 // pred_check
      _
    $region35: #{decoder_forward.1} parent=1 // pred_check_branch
      %70 = sbr.rel (0) target = $region37
    $region36: #{decoder_forward.1} parent=1 // pred_region
      _
    $region37: #{decoder_forward.1} parent=1 // pred_fallthru
      _
    // Predicated region
    $region38: #{decoder_forward.1} parent=1 // pred_check
      _
    $region39: #{decoder_forward.1} parent=1 // pred_check_branch
      %72 = sbr.rel (0) target = $region41
    $region40: #{decoder_forward.1} parent=1 // pred_region
      _
    $region41: #{decoder_forward.1} parent=1 // pred_fallthru
      _
    // Predicated region
    $region42: #{decoder_forward.1} parent=1 // pred_check
      _
    $region43: #{decoder_forward.1} parent=1 // pred_check_branch
      %74 = sbr.rel (0) target = $region45
    $region44: #{decoder_forward.1} parent=1 // pred_region
      _
    $region45: #{decoder_forward.1} parent=1 // pred_fallthru
      _
    // Predicated region
    $region46: #{decoder_forward.1} parent=1 // pred_check
      _
    $region47: #{decoder_forward.1} parent=1 // pred_check_branch
      %76 = sbr.rel (0) target = $region49
    $region48: #{decoder_forward.1} parent=1 // pred_region
      %77 = dma.done [#allocation7], 16
    $region49: #{decoder_forward.1} parent=1 // pred_fallthru
      _
    // Predicated region
    $region50: #{decoder_forward.1} parent=1 // pred_check
      _
    $region51: #{decoder_forward.1} parent=1 // pred_check_branch
      %79 = sbr.rel (0) target = $region53
    $region52: #{decoder_forward.1} parent=1 // pred_region
      %80 = dma.done [#allocation5], 256
    $region53: #{decoder_forward.1} parent=1 // pred_fallthru
      _
    // Predicated region
    $region54: #{decoder_forward.1} parent=1 // pred_check
      _
    $region55: #{decoder_forward.1} parent=1 // pred_check_branch
      %82 = sbr.rel (0) target = $region57
    $region56: #{decoder_forward.1} parent=1 // pred_region
      %83 = dma.done [#allocation10], 256
    $region57: #{decoder_forward.1} parent=1 // pred_fallthru
      _
    %84 = sfence
    %s86 = sld [smem:[#allocation4]]
    %s87 = scalar_lea.vmem %s3, %s86
    %p89 = scmp.lt.u32.totalorder 1, 8
    %p90 = pneg %p89
    // Predicated region
    $region58: #{decoder_forward.1} parent=1 // pred_check
      _
    $region59: #{decoder_forward.1} parent=1 // pred_check_branch
      %92 = sbr.rel (%p89) target = $region61
    $region60: #{decoder_forward.1} parent=1 // pred_region
      %s108 = sand.u32 1, 7
      %p109 = scmp.eq.s32.totalorder %s108, 0
      %p110 = pneg %p109
      // Predicated region
      $region73: #{decoder_forward.1} parent=60 // pred_check
        _
      $region74: #{decoder_forward.1} parent=60 // pred_check_branch
        %112 = sbr.rel (%p109) target = $region76
      $region75: #{decoder_forward.1} parent=60 // pred_region
        %s113 = sand.u32 1, 7
        %s114 = ssub.s32 1, %s113
        %s115 = scalar_lea.vmem %s87, %s114
        %s116 = ssub.s32 1, %s113
        %s117 = scalar_lea.vmem [#allocation2], %s116
        %s118 = sshll.u32 1, %s113
        %s119 = ssub.s32 %s118, 1
        loop: start=0, step=1, limit=1
        $region77: #{decoder_forward.1} parent=75 // loop_pre_header
          _
        $region78: #{decoder_forward.1} parent=75 // loop_header
          %s121 = sphi 0, %s125
          %p122 = scmp.ge.s32.totalorder %s121, 1
          %s126 = sphi %s115, %s115
          %s127 = sphi %s117, %s117
        $region79: #{decoder_forward.1} parent=75 // loop_header_branch
          %124 = sbr.rel (%p122) target = $region83
        $region80: #{decoder_forward.1} parent=75 // loop_body
          %v128 = vld [vmem:[%s126] sm:%s119]
          %129 = vst [vmem:[%s127] sm:%s119] %v128
        $region81: #{decoder_forward.1} parent=75 // loop_footer
          %s125 = sadd.s32 1, %s121
        $region82: #{decoder_forward.1} parent=75 // loop_footer_branch
          %120 = sbr.rel target = $region78
        $region83: #{decoder_forward.1} parent=75 // loop_exit
          _
      $region76: #{decoder_forward.1} parent=60 // pred_fallthru
        _
    $region61: #{decoder_forward.1} parent=1 // pred_fallthru
      _
    // Predicated region
    $region62: #{decoder_forward.1} parent=1 // pred_check
      %p93 = pneg %p89
    $region63: #{decoder_forward.1} parent=1 // pred_check_branch
      %95 = sbr.rel (%p93) target = $region65
    $region64: #{decoder_forward.1} parent=1 // pred_region
      %s96 = sshll.u32 1, 1
      %s97 = ssub.s32 %s96, 1
      loop: start=0, step=1, limit=1
      $region66: #{decoder_forward.1} parent=64 // loop_pre_header
        _
      $region67: #{decoder_forward.1} parent=64 // loop_header
        %s99 = sphi 0, %s103
        %p100 = scmp.ge.s32.totalorder %s99, 1
        %s104 = sphi %s87, %s87
        %s105 = sphi [#allocation2], [#allocation2]
      $region68: #{decoder_forward.1} parent=64 // loop_header_branch
        %102 = sbr.rel (%p100) target = $region72
      $region69: #{decoder_forward.1} parent=64 // loop_body
        %v106 = vld [vmem:[%s104] sm:%s97]
        %107 = vst [vmem:[%s105] sm:%s97] %v106
      $region70: #{decoder_forward.1} parent=64 // loop_footer
        %s103 = sadd.s32 1, %s99
      $region71: #{decoder_forward.1} parent=64 // loop_footer_branch
        %98 = sbr.rel target = $region67
      $region72: #{decoder_forward.1} parent=64 // loop_exit
        _
    $region65: #{decoder_forward.1} parent=1 // pred_fallthru
      _
    // Predicated region
    $region84: #{decoder_forward.1} parent=1 // pred_check
      _
    $region85: #{decoder_forward.1} parent=1 // pred_check_branch
      %132 = sbr.rel (0) target = $region87
    $region86: #{decoder_forward.1} parent=1 // pred_region
      %133 = vsyncadd [#allocation3], 16
    $region87: #{decoder_forward.1} parent=1 // pred_fallthru
      _
    %s134 = sld [smem:[#allocation4 + $0x1]]
    %s135 = scalar_lea.vmem %s3, %s134
    %s136 = scalar_lea.vmem [#allocation2], 1
    %s137 = scalar_lea.sflag [#allocation3], 1
    %p139 = scmp.lt.u32.totalorder 1, 8
    %p140 = pneg %p139
    // Predicated region
    $region88: #{decoder_forward.1} parent=1 // pred_check
      _
    $region89: #{decoder_forward.1} parent=1 // pred_check_branch
      %142 = sbr.rel (%p139) target = $region91
    $region90: #{decoder_forward.1} parent=1 // pred_region
      %s158 = sand.u32 1, 7
      %p159 = scmp.eq.s32.totalorder %s158, 0
      %p160 = pneg %p159
      // Predicated region
      $region103: #{decoder_forward.1} parent=90 // pred_check
        _
      $region104: #{decoder_forward.1} parent=90 // pred_check_branch
        %162 = sbr.rel (%p159) target = $region106
      $region105: #{decoder_forward.1} parent=90 // pred_region
        %s163 = sand.u32 1, 7
        %s164 = ssub.s32 1, %s163
        %s165 = scalar_lea.vmem %s135, %s164
        %s166 = ssub.s32 1, %s163
        %s167 = scalar_lea.vmem %s136, %s166 [#allocation2]
        %s168 = sshll.u32 1, %s163
        %s169 = ssub.s32 %s168, 1
        loop: start=0, step=1, limit=1
        $region107: #{decoder_forward.1} parent=105 // loop_pre_header
          _
        $region108: #{decoder_forward.1} parent=105 // loop_header
          %s171 = sphi 0, %s175
          %p172 = scmp.ge.s32.totalorder %s171, 1
          %s176 = sphi %s165, %s165
          %s177 = sphi %s167, %s167
        $region109: #{decoder_forward.1} parent=105 // loop_header_branch
          %174 = sbr.rel (%p172) target = $region113
        $region110: #{decoder_forward.1} parent=105 // loop_body
          %v178 = vld [vmem:[%s176] sm:%s169]
          %179 = vst [vmem:[%s177] sm:%s169] %v178
        $region111: #{decoder_forward.1} parent=105 // loop_footer
          %s175 = sadd.s32 1, %s171
        $region112: #{decoder_forward.1} parent=105 // loop_footer_branch
          %170 = sbr.rel target = $region108
        $region113: #{decoder_forward.1} parent=105 // loop_exit
          _
      $region106: #{decoder_forward.1} parent=90 // pred_fallthru
        _
    $region91: #{decoder_forward.1} parent=1 // pred_fallthru
      _
    // Predicated region
    $region92: #{decoder_forward.1} parent=1 // pred_check
      %p143 = pneg %p139
    $region93: #{decoder_forward.1} parent=1 // pred_check_branch
      %145 = sbr.rel (%p143) target = $region95
    $region94: #{decoder_forward.1} parent=1 // pred_region
      %s146 = sshll.u32 1, 1
      %s147 = ssub.s32 %s146, 1
      loop: start=0, step=1, limit=1
      $region96: #{decoder_forward.1} parent=94 // loop_pre_header
        _
      $region97: #{decoder_forward.1} parent=94 // loop_header
        %s149 = sphi 0, %s153
        %p150 = scmp.ge.s32.totalorder %s149, 1
        %s154 = sphi %s135, %s135
        %s155 = sphi %s136, %s136
      $region98: #{decoder_forward.1} parent=94 // loop_header_branch
        %152 = sbr.rel (%p150) target = $region102
      $region99: #{decoder_forward.1} parent=94 // loop_body
        %v156 = vld [vmem:[%s154] sm:%s147]
        %157 = vst [vmem:[%s155] sm:%s147] %v156
      $region100: #{decoder_forward.1} parent=94 // loop_footer
        %s153 = sadd.s32 1, %s149
      $region101: #{decoder_forward.1} parent=94 // loop_footer_branch
        %148 = sbr.rel target = $region97
      $region102: #{decoder_forward.1} parent=94 // loop_exit
        _
    $region95: #{decoder_forward.1} parent=1 // pred_fallthru
      _
    // Predicated region
    $region114: #{decoder_forward.1} parent=1 // pred_check
      _
    $region115: #{decoder_forward.1} parent=1 // pred_check_branch
      %182 = sbr.rel (0) target = $region117
    $region116: #{decoder_forward.1} parent=1 // pred_region
      %183 = vsyncadd %s137, 16
    $region117: #{decoder_forward.1} parent=1 // pred_fallthru
      _
    %s184 = sld [smem:[#allocation4 + $0x2]]
    %s185 = scalar_lea.vmem %s3, %s184
    %s186 = scalar_lea.vmem [#allocation2], 2
    %s187 = scalar_lea.sflag [#allocation3], 2
    %p189 = scmp.lt.u32.totalorder 1, 8
    %p190 = pneg %p189
    // Predicated region
    $region118: #{decoder_forward.1} parent=1 // pred_check
      _
    $region119: #{decoder_forward.1} parent=1 // pred_check_branch
      %192 = sbr.rel (%p189) target = $region121
    $region120: #{decoder_forward.1} parent=1 // pred_region
      %s208 = sand.u32 1, 7
      %p209 = scmp.eq.s32.totalorder %s208, 0
      %p210 = pneg %p209
      // Predicated region
      $region133: #{decoder_forward.1} parent=120 // pred_check
        _
      $region134: #{decoder_forward.1} parent=120 // pred_check_branch
        %212 = sbr.rel (%p209) target = $region136
      $region135: #{decoder_forward.1} parent=120 // pred_region
        %s213 = sand.u32 1, 7
        %s214 = ssub.s32 1, %s213
        %s215 = scalar_lea.vmem %s185, %s214
        %s216 = ssub.s32 1, %s213
        %s217 = scalar_lea.vmem %s186, %s216 [#allocation2]
        %s218 = sshll.u32 1, %s213
        %s219 = ssub.s32 %s218, 1
        loop: start=0, step=1, limit=1
        $region137: #{decoder_forward.1} parent=135 // loop_pre_header
          _
        $region138: #{decoder_forward.1} parent=135 // loop_header
          %s221 = sphi 0, %s225
          %p222 = scmp.ge.s32.totalorder %s221, 1
          %s226 = sphi %s215, %s215
          %s227 = sphi %s217, %s217
        $region139: #{decoder_forward.1} parent=135 // loop_header_branch
          %224 = sbr.rel (%p222) target = $region143
        $region140: #{decoder_forward.1} parent=135 // loop_body
          %v228 = vld [vmem:[%s226] sm:%s219]
          %229 = vst [vmem:[%s227] sm:%s219] %v228
        $region141: #{decoder_forward.1} parent=135 // loop_footer
          %s225 = sadd.s32 1, %s221
        $region142: #{decoder_forward.1} parent=135 // loop_footer_branch
          %220 = sbr.rel target = $region138
        $region143: #{decoder_forward.1} parent=135 // loop_exit
          _
      $region136: #{decoder_forward.1} parent=120 // pred_fallthru
        _
    $region121: #{decoder_forward.1} parent=1 // pred_fallthru
      _
    // Predicated region
    $region122: #{decoder_forward.1} parent=1 // pred_check
      %p193 = pneg %p189
    $region123: #{decoder_forward.1} parent=1 // pred_check_branch
      %195 = sbr.rel (%p193) target = $region125
    $region124: #{decoder_forward.1} parent=1 // pred_region
      %s196 = sshll.u32 1, 1
      %s197 = ssub.s32 %s196, 1
      loop: start=0, step=1, limit=1
      $region126: #{decoder_forward.1} parent=124 // loop_pre_header
        _
      $region127: #{decoder_forward.1} parent=124 // loop_header
        %s199 = sphi 0, %s203
        %p200 = scmp.ge.s32.totalorder %s199, 1
        %s204 = sphi %s185, %s185
        %s205 = sphi %s186, %s186
      $region128: #{decoder_forward.1} parent=124 // loop_header_branch
        %202 = sbr.rel (%p200) target = $region132
      $region129: #{decoder_forward.1} parent=124 // loop_body
        %v206 = vld [vmem:[%s204] sm:%s197]
        %207 = vst [vmem:[%s205] sm:%s197] %v206
      $region130: #{decoder_forward.1} parent=124 // loop_footer
        %s203 = sadd.s32 1, %s199
      $region131: #{decoder_forward.1} parent=124 // loop_footer_branch
        %198 = sbr.rel target = $region127
      $region132: #{decoder_forward.1} parent=124 // loop_exit
        _
    $region125: #{decoder_forward.1} parent=1 // pred_fallthru
      _
    // Predicated region
    $region144: #{decoder_forward.1} parent=1 // pred_check
      _
    $region145: #{decoder_forward.1} parent=1 // pred_check_branch
      %232 = sbr.rel (0) target = $region147
    $region146: #{decoder_forward.1} parent=1 // pred_region
      %233 = vsyncadd %s187, 16
    $region147: #{decoder_forward.1} parent=1 // pred_fallthru
      _
    %s234 = sld [smem:[#allocation4 + $0x3]]
    %s235 = scalar_lea.vmem %s3, %s234
    %s236 = scalar_lea.vmem [#allocation2], 3
    %s237 = scalar_lea.sflag [#allocation3], 3
    %p239 = scmp.lt.u32.totalorder 1, 8
    %p240 = pneg %p239
    // Predicated region
    $region148: #{decoder_forward.1} parent=1 // pred_check
      _
    $region149: #{decoder_forward.1} parent=1 // pred_check_branch
      %242 = sbr.rel (%p239) target = $region151
    $region150: #{decoder_forward.1} parent=1 // pred_region
      %s258 = sand.u32 1, 7
      %p259 = scmp.eq.s32.totalorder %s258, 0
      %p260 = pneg %p259
      // Predicated region
      $region163: #{decoder_forward.1} parent=150 // pred_check
        _
      $region164: #{decoder_forward.1} parent=150 // pred_check_branch
        %262 = sbr.rel (%p259) target = $region166
      $region165: #{decoder_forward.1} parent=150 // pred_region
        %s263 = sand.u32 1, 7
        %s264 = ssub.s32 1, %s263
        %s265 = scalar_lea.vmem %s235, %s264
        %s266 = ssub.s32 1, %s263
        %s267 = scalar_lea.vmem %s236, %s266 [#allocation2]
        %s268 = sshll.u32 1, %s263
        %s269 = ssub.s32 %s268, 1
        loop: start=0, step=1, limit=1
        $region167: #{decoder_forward.1} parent=165 // loop_pre_header
          _
        $region168: #{decoder_forward.1} parent=165 // loop_header
          %s271 = sphi 0, %s275
          %p272 = scmp.ge.s32.totalorder %s271, 1
          %s276 = sphi %s265, %s265
          %s277 = sphi %s267, %s267
        $region169: #{decoder_forward.1} parent=165 // loop_header_branch
          %274 = sbr.rel (%p272) target = $region173
        $region170: #{decoder_forward.1} parent=165 // loop_body
          %v278 = vld [vmem:[%s276] sm:%s269]
          %279 = vst [vmem:[%s277] sm:%s269] %v278
        $region171: #{decoder_forward.1} parent=165 // loop_footer
          %s275 = sadd.s32 1, %s271
        $region172: #{decoder_forward.1} parent=165 // loop_footer_branch
          %270 = sbr.rel target = $region168
        $region173: #{decoder_forward.1} parent=165 // loop_exit
          _
      $region166: #{decoder_forward.1} parent=150 // pred_fallthru
        _
    $region151: #{decoder_forward.1} parent=1 // pred_fallthru
      _
    // Predicated region
    $region152: #{decoder_forward.1} parent=1 // pred_check
      %p243 = pneg %p239
    $region153: #{decoder_forward.1} parent=1 // pred_check_branch
      %245 = sbr.rel (%p243) target = $region155
    $region154: #{decoder_forward.1} parent=1 // pred_region
      %s246 = sshll.u32 1, 1
      %s247 = ssub.s32 %s246, 1
      loop: start=0, step=1, limit=1
      $region156: #{decoder_forward.1} parent=154 // loop_pre_header
        _
      $region157: #{decoder_forward.1} parent=154 // loop_header
        %s249 = sphi 0, %s253
        %p250 = scmp.ge.s32.totalorder %s249, 1
        %s254 = sphi %s235, %s235
        %s255 = sphi %s236, %s236
      $region158: #{decoder_forward.1} parent=154 // loop_header_branch
        %252 = sbr.rel (%p250) target = $region162
      $region159: #{decoder_forward.1} parent=154 // loop_body
        %v256 = vld [vmem:[%s254] sm:%s247]
        %257 = vst [vmem:[%s255] sm:%s247] %v256
      $region160: #{decoder_forward.1} parent=154 // loop_footer
        %s253 = sadd.s32 1, %s249
      $region161: #{decoder_forward.1} parent=154 // loop_footer_branch
        %248 = sbr.rel target = $region157
      $region162: #{decoder_forward.1} parent=154 // loop_exit
        _
    $region155: #{decoder_forward.1} parent=1 // pred_fallthru
      _
    // Predicated region
    $region174: #{decoder_forward.1} parent=1 // pred_check
      _
    $region175: #{decoder_forward.1} parent=1 // pred_check_branch
      %282 = sbr.rel (0) target = $region177
    $region176: #{decoder_forward.1} parent=1 // pred_region
      %283 = vsyncadd %s237, 16
    $region177: #{decoder_forward.1} parent=1 // pred_fallthru
      _
    %s284 = sld [smem:[#allocation4 + $0x4]]
    %s285 = scalar_lea.vmem %s3, %s284
    %s286 = scalar_lea.vmem [#allocation2], 4
    %s287 = scalar_lea.sflag [#allocation3], 4
    %p289 = scmp.lt.u32.totalorder 1, 8
    %p290 = pneg %p289
    // Predicated region
    $region178: #{decoder_forward.1} parent=1 // pred_check
      _
    $region179: #{decoder_forward.1} parent=1 // pred_check_branch
      %292 = sbr.rel (%p289) target = $region181
    $region180: #{decoder_forward.1} parent=1 // pred_region
      %s308 = sand.u32 1, 7
      %p309 = scmp.eq.s32.totalorder %s308, 0
      %p310 = pneg %p309
      // Predicated region
      $region193: #{decoder_forward.1} parent=180 // pred_check
        _
      $region194: #{decoder_forward.1} parent=180 // pred_check_branch
        %312 = sbr.rel (%p309) target = $region196
      $region195: #{decoder_forward.1} parent=180 // pred_region
        %s313 = sand.u32 1, 7
        %s314 = ssub.s32 1, %s313
        %s315 = scalar_lea.vmem %s285, %s314
        %s316 = ssub.s32 1, %s313
        %s317 = scalar_lea.vmem %s286, %s316 [#allocation2]
        %s318 = sshll.u32 1, %s313
        %s319 = ssub.s32 %s318, 1
        loop: start=0, step=1, limit=1
        $region197: #{decoder_forward.1} parent=195 // loop_pre_header
          _
        $region198: #{decoder_forward.1} parent=195 // loop_header
          %s321 = sphi 0, %s325
          %p322 = scmp.ge.s32.totalorder %s321, 1
          %s326 = sphi %s315, %s315
          %s327 = sphi %s317, %s317
        $region199: #{decoder_forward.1} parent=195 // loop_header_branch
          %324 = sbr.rel (%p322) target = $region203
        $region200: #{decoder_forward.1} parent=195 // loop_body
          %v328 = vld [vmem:[%s326] sm:%s319]
          %329 = vst [vmem:[%s327] sm:%s319] %v328
        $region201: #{decoder_forward.1} parent=195 // loop_footer
          %s325 = sadd.s32 1, %s321
        $region202: #{decoder_forward.1} parent=195 // loop_footer_branch
          %320 = sbr.rel target = $region198
        $region203: #{decoder_forward.1} parent=195 // loop_exit
          _
      $region196: #{decoder_forward.1} parent=180 // pred_fallthru
        _
    $region181: #{decoder_forward.1} parent=1 // pred_fallthru
      _
    // Predicated region
    $region182: #{decoder_forward.1} parent=1 // pred_check
      %p293 = pneg %p289
    $region183: #{decoder_forward.1} parent=1 // pred_check_branch
      %295 = sbr.rel (%p293) target = $region185
    $region184: #{decoder_forward.1} parent=1 // pred_region
      %s296 = sshll.u32 1, 1
      %s297 = ssub.s32 %s296, 1
      loop: start=0, step=1, limit=1
      $region186: #{decoder_forward.1} parent=184 // loop_pre_header
        _
      $region187: #{decoder_forward.1} parent=184 // loop_header
        %s299 = sphi 0, %s303
        %p300 = scmp.ge.s32.totalorder %s299, 1
        %s304 = sphi %s285, %s285
        %s305 = sphi %s286, %s286
      $region188: #{decoder_forward.1} parent=184 // loop_header_branch
        %302 = sbr.rel (%p300) target = $region192
      $region189: #{decoder_forward.1} parent=184 // loop_body
        %v306 = vld [vmem:[%s304] sm:%s297]
        %307 = vst [vmem:[%s305] sm:%s297] %v306
      $region190: #{decoder_forward.1} parent=184 // loop_footer
        %s303 = sadd.s32 1, %s299
      $region191: #{decoder_forward.1} parent=184 // loop_footer_branch
        %298 = sbr.rel target = $region187
      $region192: #{decoder_forward.1} parent=184 // loop_exit
        _
    $region185: #{decoder_forward.1} parent=1 // pred_fallthru
      _
    // Predicated region
    $region204: #{decoder_forward.1} parent=1 // pred_check
      _
    $region205: #{decoder_forward.1} parent=1 // pred_check_branch
      %332 = sbr.rel (0) target = $region207
    $region206: #{decoder_forward.1} parent=1 // pred_region
      %333 = vsyncadd %s287, 16
    $region207: #{decoder_forward.1} parent=1 // pred_fallthru
      _
    %s334 = sld [smem:[#allocation4 + $0x5]]
    %s335 = scalar_lea.vmem %s3, %s334
    %s336 = scalar_lea.vmem [#allocation2], 5
    %s337 = scalar_lea.sflag [#allocation3], 5
    %p339 = scmp.lt.u32.totalorder 1, 8
    %p340 = pneg %p339
    // Predicated region
    $region208: #{decoder_forward.1} parent=1 // pred_check
      _
    $region209: #{decoder_forward.1} parent=1 // pred_check_branch
      %342 = sbr.rel (%p339) target = $region211
    $region210: #{decoder_forward.1} parent=1 // pred_region
      %s358 = sand.u32 1, 7
      %p359 = scmp.eq.s32.totalorder %s358, 0
      %p360 = pneg %p359
      // Predicated region
      $region223: #{decoder_forward.1} parent=210 // pred_check
        _
      $region224: #{decoder_forward.1} parent=210 // pred_check_branch
        %362 = sbr.rel (%p359) target = $region226
      $region225: #{decoder_forward.1} parent=210 // pred_region
        %s363 = sand.u32 1, 7
        %s364 = ssub.s32 1, %s363
        %s365 = scalar_lea.vmem %s335, %s364
        %s366 = ssub.s32 1, %s363
        %s367 = scalar_lea.vmem %s336, %s366 [#allocation2]
        %s368 = sshll.u32 1, %s363
        %s369 = ssub.s32 %s368, 1
        loop: start=0, step=1, limit=1
        $region227: #{decoder_forward.1} parent=225 // loop_pre_header
          _
        $region228: #{decoder_forward.1} parent=225 // loop_header
          %s371 = sphi 0, %s375
          %p372 = scmp.ge.s32.totalorder %s371, 1
          %s376 = sphi %s365, %s365
          %s377 = sphi %s367, %s367
        $region229: #{decoder_forward.1} parent=225 // loop_header_branch
          %374 = sbr.rel (%p372) target = $region233
        $region230: #{decoder_forward.1} parent=225 // loop_body
          %v378 = vld [vmem:[%s376] sm:%s369]
          %379 = vst [vmem:[%s377] sm:%s369] %v378
        $region231: #{decoder_forward.1} parent=225 // loop_footer
          %s375 = sadd.s32 1, %s371
        $region232: #{decoder_forward.1} parent=225 // loop_footer_branch
          %370 = sbr.rel target = $region228
        $region233: #{decoder_forward.1} parent=225 // loop_exit
          _
      $region226: #{decoder_forward.1} parent=210 // pred_fallthru
        _
    $region211: #{decoder_forward.1} parent=1 // pred_fallthru
      _
    // Predicated region
    $region212: #{decoder_forward.1} parent=1 // pred_check
      %p343 = pneg %p339
    $region213: #{decoder_forward.1} parent=1 // pred_check_branch
      %345 = sbr.rel (%p343) target = $region215
    $region214: #{decoder_forward.1} parent=1 // pred_region
      %s346 = sshll.u32 1, 1
      %s347 = ssub.s32 %s346, 1
      loop: start=0, step=1, limit=1
      $region216: #{decoder_forward.1} parent=214 // loop_pre_header
        _
      $region217: #{decoder_forward.1} parent=214 // loop_header
        %s349 = sphi 0, %s353
        %p350 = scmp.ge.s32.totalorder %s349, 1
        %s354 = sphi %s335, %s335
        %s355 = sphi %s336, %s336
      $region218: #{decoder_forward.1} parent=214 // loop_header_branch
        %352 = sbr.rel (%p350) target = $region222
      $region219: #{decoder_forward.1} parent=214 // loop_body
        %v356 = vld [vmem:[%s354] sm:%s347]
        %357 = vst [vmem:[%s355] sm:%s347] %v356
      $region220: #{decoder_forward.1} parent=214 // loop_footer
        %s353 = sadd.s32 1, %s349
      $region221: #{decoder_forward.1} parent=214 // loop_footer_branch
        %348 = sbr.rel target = $region217
      $region222: #{decoder_forward.1} parent=214 // loop_exit
        _
    $region215: #{decoder_forward.1} parent=1 // pred_fallthru
      _
    // Predicated region
    $region234: #{decoder_forward.1} parent=1 // pred_check
      _
    $region235: #{decoder_forward.1} parent=1 // pred_check_branch
      %382 = sbr.rel (0) target = $region237
    $region236: #{decoder_forward.1} parent=1 // pred_region
      %383 = vsyncadd %s337, 16
    $region237: #{decoder_forward.1} parent=1 // pred_fallthru
      _
    %s384 = sld [smem:[#allocation4 + $0x6]]
    %s385 = scalar_lea.vmem %s3, %s384
    %s386 = scalar_lea.vmem [#allocation2], 6
    %s387 = scalar_lea.sflag [#allocation3], 6
    %p389 = scmp.lt.u32.totalorder 1, 8
    %p390 = pneg %p389
    // Predicated region
    $region238: #{decoder_forward.1} parent=1 // pred_check
      _
    $region239: #{decoder_forward.1} parent=1 // pred_check_branch
      %392 = sbr.rel (%p389) target = $region241
    $region240: #{decoder_forward.1} parent=1 // pred_region
      %s408 = sand.u32 1, 7
      %p409 = scmp.eq.s32.totalorder %s408, 0
      %p410 = pneg %p409
      // Predicated region
      $region253: #{decoder_forward.1} parent=240 // pred_check
        _
      $region254: #{decoder_forward.1} parent=240 // pred_check_branch
        %412 = sbr.rel (%p409) target = $region256
      $region255: #{decoder_forward.1} parent=240 // pred_region
        %s413 = sand.u32 1, 7
        %s414 = ssub.s32 1, %s413
        %s415 = scalar_lea.vmem %s385, %s414
        %s416 = ssub.s32 1, %s413
        %s417 = scalar_lea.vmem %s386, %s416 [#allocation2]
        %s418 = sshll.u32 1, %s413
        %s419 = ssub.s32 %s418, 1
        loop: start=0, step=1, limit=1
        $region257: #{decoder_forward.1} parent=255 // loop_pre_header
          _
        $region258: #{decoder_forward.1} parent=255 // loop_header
          %s421 = sphi 0, %s425
          %p422 = scmp.ge.s32.totalorder %s421, 1
          %s426 = sphi %s415, %s415
          %s427 = sphi %s417, %s417
        $region259: #{decoder_forward.1} parent=255 // loop_header_branch
          %424 = sbr.rel (%p422) target = $region263
        $region260: #{decoder_forward.1} parent=255 // loop_body
          %v428 = vld [vmem:[%s426] sm:%s419]
          %429 = vst [vmem:[%s427] sm:%s419] %v428
        $region261: #{decoder_forward.1} parent=255 // loop_footer
          %s425 = sadd.s32 1, %s421
        $region262: #{decoder_forward.1} parent=255 // loop_footer_branch
          %420 = sbr.rel target = $region258
        $region263: #{decoder_forward.1} parent=255 // loop_exit
          _
      $region256: #{decoder_forward.1} parent=240 // pred_fallthru
        _
    $region241: #{decoder_forward.1} parent=1 // pred_fallthru
      _
    // Predicated region
    $region242: #{decoder_forward.1} parent=1 // pred_check
      %p393 = pneg %p389
    $region243: #{decoder_forward.1} parent=1 // pred_check_branch
      %395 = sbr.rel (%p393) target = $region245
    $region244: #{decoder_forward.1} parent=1 // pred_region
      %s396 = sshll.u32 1, 1
      %s397 = ssub.s32 %s396, 1
      loop: start=0, step=1, limit=1
      $region246: #{decoder_forward.1} parent=244 // loop_pre_header
        _
      $region247: #{decoder_forward.1} parent=244 // loop_header
        %s399 = sphi 0, %s403
        %p400 = scmp.ge.s32.totalorder %s399, 1
        %s404 = sphi %s385, %s385
        %s405 = sphi %s386, %s386
      $region248: #{decoder_forward.1} parent=244 // loop_header_branch
        %402 = sbr.rel (%p400) target = $region252
      $region249: #{decoder_forward.1} parent=244 // loop_body
        %v406 = vld [vmem:[%s404] sm:%s397]
        %407 = vst [vmem:[%s405] sm:%s397] %v406
      $region250: #{decoder_forward.1} parent=244 // loop_footer
        %s403 = sadd.s32 1, %s399
      $region251: #{decoder_forward.1} parent=244 // loop_footer_branch
        %398 = sbr.rel target = $region247
      $region252: #{decoder_forward.1} parent=244 // loop_exit
        _
    $region245: #{decoder_forward.1} parent=1 // pred_fallthru
      _
    // Predicated region
    $region264: #{decoder_forward.1} parent=1 // pred_check
      _
    $region265: #{decoder_forward.1} parent=1 // pred_check_branch
      %432 = sbr.rel (0) target = $region267
    $region266: #{decoder_forward.1} parent=1 // pred_region
      %433 = vsyncadd %s387, 16
    $region267: #{decoder_forward.1} parent=1 // pred_fallthru
      _
    %s434 = sld [smem:[#allocation4 + $0x7]]
    %s435 = scalar_lea.vmem %s3, %s434
    %s436 = scalar_lea.vmem [#allocation2], 7
    %s437 = scalar_lea.sflag [#allocation3], 7
    %p439 = scmp.lt.u32.totalorder 1, 8
    %p440 = pneg %p439
    // Predicated region
    $region268: #{decoder_forward.1} parent=1 // pred_check
      _
    $region269: #{decoder_forward.1} parent=1 // pred_check_branch
      %442 = sbr.rel (%p439) target = $region271
    $region270: #{decoder_forward.1} parent=1 // pred_region
      %s458 = sand.u32 1, 7
      %p459 = scmp.eq.s32.totalorder %s458, 0
      %p460 = pneg %p459
      // Predicated region
      $region283: #{decoder_forward.1} parent=270 // pred_check
        _
      $region284: #{decoder_forward.1} parent=270 // pred_check_branch
        %462 = sbr.rel (%p459) target = $region286
      $region285: #{decoder_forward.1} parent=270 // pred_region
        %s463 = sand.u32 1, 7
        %s464 = ssub.s32 1, %s463
        %s465 = scalar_lea.vmem %s435, %s464
        %s466 = ssub.s32 1, %s463
        %s467 = scalar_lea.vmem %s436, %s466 [#allocation2]
        %s468 = sshll.u32 1, %s463
        %s469 = ssub.s32 %s468, 1
        loop: start=0, step=1, limit=1
        $region287: #{decoder_forward.1} parent=285 // loop_pre_header
          _
        $region288: #{decoder_forward.1} parent=285 // loop_header
          %s471 = sphi 0, %s475
          %p472 = scmp.ge.s32.totalorder %s471, 1
          %s476 = sphi %s465, %s465
          %s477 = sphi %s467, %s467
        $region289: #{decoder_forward.1} parent=285 // loop_header_branch
          %474 = sbr.rel (%p472) target = $region293
        $region290: #{decoder_forward.1} parent=285 // loop_body
          %v478 = vld [vmem:[%s476] sm:%s469]
          %479 = vst [vmem:[%s477] sm:%s469] %v478
        $region291: #{decoder_forward.1} parent=285 // loop_footer
          %s475 = sadd.s32 1, %s471
        $region292: #{decoder_forward.1} parent=285 // loop_footer_branch
          %470 = sbr.rel target = $region288
        $region293: #{decoder_forward.1} parent=285 // loop_exit
          _
      $region286: #{decoder_forward.1} parent=270 // pred_fallthru
        _
    $region271: #{decoder_forward.1} parent=1 // pred_fallthru
      _
    // Predicated region
    $region272: #{decoder_forward.1} parent=1 // pred_check
      %p443 = pneg %p439
    $region273: #{decoder_forward.1} parent=1 // pred_check_branch
      %445 = sbr.rel (%p443) target = $region275
    $region274: #{decoder_forward.1} parent=1 // pred_region
      %s446 = sshll.u32 1, 1
      %s447 = ssub.s32 %s446, 1
      loop: start=0, step=1, limit=1
      $region276: #{decoder_forward.1} parent=274 // loop_pre_header
        _
      $region277: #{decoder_forward.1} parent=274 // loop_header
        %s449 = sphi 0, %s453
        %p450 = scmp.ge.s32.totalorder %s449, 1
        %s454 = sphi %s435, %s435
        %s455 = sphi %s436, %s436
      $region278: #{decoder_forward.1} parent=274 // loop_header_branch
        %452 = sbr.rel (%p450) target = $region282
      $region279: #{decoder_forward.1} parent=274 // loop_body
        %v456 = vld [vmem:[%s454] sm:%s447]
        %457 = vst [vmem:[%s455] sm:%s447] %v456
      $region280: #{decoder_forward.1} parent=274 // loop_footer
        %s453 = sadd.s32 1, %s449
      $region281: #{decoder_forward.1} parent=274 // loop_footer_branch
        %448 = sbr.rel target = $region277
      $region282: #{decoder_forward.1} parent=274 // loop_exit
        _
    $region275: #{decoder_forward.1} parent=1 // pred_fallthru
      _
    // Predicated region
    $region294: #{decoder_forward.1} parent=1 // pred_check
      _
    $region295: #{decoder_forward.1} parent=1 // pred_check_branch
      %482 = sbr.rel (0) target = $region297
    $region296: #{decoder_forward.1} parent=1 // pred_region
      %483 = vsyncadd %s437, 16
    $region297: #{decoder_forward.1} parent=1 // pred_fallthru
      _
    %s484 = smul.u32 1, 1
    %s485 = sshll.u32 %s484, 4
    %486 = dma.done [#allocation3], %s485
    %s487 = sshll.u32 %s484, 4
    %488 = dma.done %s137, %s487
    %s489 = sshll.u32 %s484, 4
    %490 = dma.done %s187, %s489
    %s491 = sshll.u32 %s484, 4
    %492 = dma.done %s237, %s491
    %s493 = sshll.u32 %s484, 4
    %494 = dma.done %s287, %s493
    %s495 = sshll.u32 %s484, 4
    %496 = dma.done %s337, %s495
    %s497 = sshll.u32 %s484, 4
    %498 = dma.done %s387, %s497
    %s499 = sshll.u32 %s484, 4
    %500 = dma.done %s437, %s499
    %v501 = vld [vmem:[#allocation2] sm:$0xff]
    %v502 = vpack.c.bf16 %v501, %v501
    %v503 = vld [vmem:[#allocation8] sm:$0xff]
    %v504 = vld [vmem:[#allocation9] sm:$0xff]
    %v505 = vld [vmem:[%s4] sm:$0xf]
    %v506 = vld [vmem:[%s4 + $0x4] sm:$0xf]
    %v507 = vld [vmem:[%s4 + $0x8] sm:$0xf]
    %v508 = vld [vmem:[%s4 + $0xc] sm:$0xf]
    %v509 = vpack.c.bf16 %v503, %v503
    %v510 = vld [vmem:[%s5] sm:$0xf]
    %v511 = vld [vmem:[%s5 + $0x4] sm:$0xf]
    %v512 = vld [vmem:[%s5 + $0x8] sm:$0xf]
    %v513 = vld [vmem:[%s5 + $0xc] sm:$0xf]
    %v518 = vunpack.c.l.b16 %v510
    %v519 = vunpack.c.l.b16 %v511
    %v520 = vunpack.c.l.b16 %v512
    %v521 = vunpack.c.l.b16 %v513
    %v522 = vpack.c.b16 %v519, %v518
    %v523 = vpack.c.b16 %v521, %v520
    %vm526 = vcmask 261120
    %v528 = vsel %vm526, %v509, 0
    %530 = vmatprep.subr.bf16.mxu0 0
    %531 = vmatpush1.bf16.msra.mxu0 0
    %532 = vmatprep.subr.bf16.mxu0 0
    %533 = vmatpush1.bf16.msra.mxu0 0
    %534 = vmatprep.subr.bf16.mxu0 0
    %535 = vmatpush1.bf16.msra.mxu0 0
    %536 = vmatprep.subr.bf16.mxu0 0
    %537 = vmatpush1.bf16.msra.mxu0 0
    %538 = vmatprep.subr.bf16.mxu0 0
    %539 = vmatpush1.bf16.msra.mxu0 0
    %540 = vmatprep.subr.bf16.mxu0 0
    %541 = vmatpush1.bf16.msra.mxu0 0
    %542 = vmatprep.subr.bf16.mxu0 0
    %543 = vmatpush1.bf16.msra.mxu0 %v523
    %544 = vmatprep.subr.bf16.mxu0 0
    %545 = vmatpush1.bf16.msra.mxu0 %v522
    %546 = vmatprep.subr.bf16.mxu0 0
    %547 = vmatpush2.bf16.msra.mxu0 0
    %548 = vmatprep.subr.bf16.mxu0 0
    %549 = vmatpush2.bf16.msra.mxu0 0
    %550 = vmatprep.subr.bf16.mxu0 0
    %551 = vmatpush2.bf16.msra.mxu0 0
    %552 = vmatprep.subr.bf16.mxu0 0
    %553 = vmatpush2.bf16.msra.mxu0 0
    %554 = vmatprep.subr.bf16.mxu0 0
    %555 = vmatpush2.bf16.msra.mxu0 0
    %556 = vmatprep.subr.bf16.mxu0 0
    %557 = vmatpush2.bf16.msra.mxu0 0
    %558 = vmatprep.subr.bf16.mxu0 0
    %559 = vmatpush2.bf16.msra.mxu0 0
    %560 = vmatprep.subr.bf16.mxu0 0
    %561 = vmatpush2.bf16.msra.mxu0 0
    %562 = vmatprep.mubr.bf16.mxu0 0
    %563 = vmatmul.mubr.bf16.gmra.mxu0 %v528
    %v564 = vpop.f32.mrf.mxu0
    %v565 = vadd.f32 0.0, %v564
    %v566 = vpop.f32.mrf.mxu0
    %v567 = vpop.f32.mrf.mxu0
    %v568 = vpop.f32.mrf.mxu0
    %569 = vdwg.mxu0
    %v574 = vunpack.c.l.b16 %v505
    %v575 = vunpack.c.l.b16 %v506
    %v576 = vunpack.c.l.b16 %v507
    %v577 = vunpack.c.l.b16 %v508
    %v578 = vpack.c.b16 %v575, %v574
    %v579 = vpack.c.b16 %v577, %v576
    %v583 = vsel %vm526, %v502, 0
    %585 = vmatprep.subr.bf16.mxu0 0
    %586 = vmatpush1.bf16.msra.mxu0 0
    %587 = vmatprep.subr.bf16.mxu0 0
    %588 = vmatpush1.bf16.msra.mxu0 0
    %589 = vmatprep.subr.bf16.mxu0 0
    %590 = vmatpush1.bf16.msra.mxu0 0
    %591 = vmatprep.subr.bf16.mxu0 0
    %592 = vmatpush1.bf16.msra.mxu0 0
    %593 = vmatprep.subr.bf16.mxu0 0
    %594 = vmatpush1.bf16.msra.mxu0 0
    %595 = vmatprep.subr.bf16.mxu0 0
    %596 = vmatpush1.bf16.msra.mxu0 0
    %597 = vmatprep.subr.bf16.mxu0 0
    %598 = vmatpush1.bf16.msra.mxu0 %v579
    %599 = vmatprep.subr.bf16.mxu0 0
    %600 = vmatpush1.bf16.msra.mxu0 %v578
    %601 = vmatprep.subr.bf16.mxu0 0
    %602 = vmatpush2.bf16.msra.mxu0 0
    %603 = vmatprep.subr.bf16.mxu0 0
    %604 = vmatpush2.bf16.msra.mxu0 0
    %605 = vmatprep.subr.bf16.mxu0 0
    %606 = vmatpush2.bf16.msra.mxu0 0
    %607 = vmatprep.subr.bf16.mxu0 0
    %608 = vmatpush2.bf16.msra.mxu0 0
    %609 = vmatprep.subr.bf16.mxu0 0
    %610 = vmatpush2.bf16.msra.mxu0 0
    %611 = vmatprep.subr.bf16.mxu0 0
    %612 = vmatpush2.bf16.msra.mxu0 0
    %613 = vmatprep.subr.bf16.mxu0 0
    %614 = vmatpush2.bf16.msra.mxu0 0
    %615 = vmatprep.subr.bf16.mxu0 0
    %616 = vmatpush2.bf16.msra.mxu0 0
    %617 = vmatprep.mubr.bf16.mxu0 0
    %618 = vmatmul.mubr.bf16.gmra.mxu0 %v583
    %v619 = vpop.f32.mrf.mxu0
    %v620 = vadd.f32 %v565, %v619
    %v621 = vpop.f32.mrf.mxu0
    %v622 = vpop.f32.mrf.mxu0
    %v623 = vpop.f32.mrf.mxu0
    %624 = vdwg.mxu0
    %v625 = vld [vmem:[%s6] sm:$0x1]
    %v627 = vlaneseq
    %v628 = vshrl.u32 %v627, 7
    %v629 = vsub.s32 0, %v628
    %v630 = vrot.slane %v625, %v629
    %v632 = vadd.f32 %v620, %v630
    %v633 = vxor.u32 %v632, 2147483648
    %v634 = vmul.f32 %v633, 1.442695
    %v635 = vpow.pop %v634
    %v636 = vadd.f32 %v635, 1.0
    %v637 = vrcp.pop %v636
    %v638 = vmul.f32 1.0, %v637
    %v639 = vtanh.pop %v632
    %641 = vrot.lane.b32.xlu0 %v504, 32
    %v642 = vpop.permute.xlu0 %641
    %v644 = vmul.f32 %v638, %v642
    %646 = vrot.lane.b32.xlu0 %v639, 64
    %v647 = vpop.permute.xlu0 %646
    %v649 = vmul.f32 %v638, %v647
    %651 = vrot.lane.b32.xlu0 %v649, 32
    %v652 = vpop.permute.xlu0 %651
    %v654 = vadd.f32 %v644, %v652
    %v655 = vtanh.pop %v654
    %657 = vrot.lane.b32.xlu0 %v655, 64
    %v658 = vpop.permute.xlu0 %657
    %v660 = vmul.f32 %v638, %v658
    %662 = vrot.lane.b32.xlu0 %v660, 32
    %v663 = vpop.permute.xlu0 %662
    %665 = vst.msk [vmem:[#allocation12] sm:$0xff] %vm526, %v663
    %667 = vrot.lane.b32.xlu0 %v654, 96
    %v668 = vpop.permute.xlu0 %667
    %670 = vst.msk [vmem:[#allocation14] sm:$0xff] %vm526, %v668
    %v671 = vpack.c.bf16 %v660, %v660
    %s672 = scalar_lea.vmem [#allocation8], 8
    %v673 = vld [vmem:[%s672] sm:$0xff]
    %s674 = scalar_lea.vmem [#allocation9], 8
    %v675 = vld [vmem:[%s674] sm:$0xff]
    %v676 = vld [vmem:[%s7] sm:$0xf]
    %v677 = vld [vmem:[%s7 + $0x4] sm:$0xf]
    %v678 = vld [vmem:[%s7 + $0x8] sm:$0xf]
    %v679 = vld [vmem:[%s7 + $0xc] sm:$0xf]
    %v680 = vpack.c.bf16 %v673, %v673
    %v681 = vld [vmem:[%s8] sm:$0xf]
    %v682 = vld [vmem:[%s8 + $0x4] sm:$0xf]
    %v683 = vld [vmem:[%s8 + $0x8] sm:$0xf]
    %v684 = vld [vmem:[%s8 + $0xc] sm:$0xf]
    %v689 = vunpack.c.l.b16 %v681
    %v690 = vunpack.c.l.b16 %v682
    %v691 = vunpack.c.l.b16 %v683
    %v692 = vunpack.c.l.b16 %v684
    %v693 = vpack.c.b16 %v690, %v689
    %v694 = vpack.c.b16 %v692, %v691
    %v698 = vsel %vm526, %v680, 0
    %700 = vmatprep.subr.bf16.mxu0 0
    %701 = vmatpush1.bf16.msra.mxu0 0
    %702 = vmatprep.subr.bf16.mxu0 0
    %703 = vmatpush1.bf16.msra.mxu0 0
    %704 = vmatprep.subr.bf16.mxu0 0
    %705 = vmatpush1.bf16.msra.mxu0 0
    %706 = vmatprep.subr.bf16.mxu0 0
    %707 = vmatpush1.bf16.msra.mxu0 0
    %708 = vmatprep.subr.bf16.mxu0 0
    %709 = vmatpush1.bf16.msra.mxu0 0
    %710 = vmatprep.subr.bf16.mxu0 0
    %711 = vmatpush1.bf16.msra.mxu0 0
    %712 = vmatprep.subr.bf16.mxu0 0
    %713 = vmatpush1.bf16.msra.mxu0 %v694
    %714 = vmatprep.subr.bf16.mxu0 0
    %715 = vmatpush1.bf16.msra.mxu0 %v693
    %716 = vmatprep.subr.bf16.mxu0 0
    %717 = vmatpush2.bf16.msra.mxu0 0
    %718 = vmatprep.subr.bf16.mxu0 0
    %719 = vmatpush2.bf16.msra.mxu0 0
    %720 = vmatprep.subr.bf16.mxu0 0
    %721 = vmatpush2.bf16.msra.mxu0 0
    %722 = vmatprep.subr.bf16.mxu0 0
    %723 = vmatpush2.bf16.msra.mxu0 0
    %724 = vmatprep.subr.bf16.mxu0 0
    %725 = vmatpush2.bf16.msra.mxu0 0
    %726 = vmatprep.subr.bf16.mxu0 0
    %727 = vmatpush2.bf16.msra.mxu0 0
    %728 = vmatprep.subr.bf16.mxu0 0
    %729 = vmatpush2.bf16.msra.mxu0 0
    %730 = vmatprep.subr.bf16.mxu0 0
    %731 = vmatpush2.bf16.msra.mxu0 0
    %732 = vmatprep.mubr.bf16.mxu0 0
    %733 = vmatmul.mubr.bf16.gmra.mxu0 %v698
    %v734 = vpop.f32.mrf.mxu0
    %v735 = vadd.f32 0.0, %v734
    %v736 = vpop.f32.mrf.mxu0
    %v737 = vpop.f32.mrf.mxu0
    %v738 = vpop.f32.mrf.mxu0
    %739 = vdwg.mxu0
    %741 = vrot.lane.b32.xlu0 %v671, 32
    %v742 = vpop.permute.xlu0 %741
    %v747 = vunpack.c.l.b16 %v676
    %v748 = vunpack.c.l.b16 %v677
    %v749 = vunpack.c.l.b16 %v678
    %v750 = vunpack.c.l.b16 %v679
    %v751 = vpack.c.b16 %v748, %v747
    %v752 = vpack.c.b16 %v750, %v749
    %v756 = vsel %vm526, %v742, 0
    %758 = vmatprep.subr.bf16.mxu0 0
    %759 = vmatpush1.bf16.msra.mxu0 0
    %760 = vmatprep.subr.bf16.mxu0 0
    %761 = vmatpush1.bf16.msra.mxu0 0
    %762 = vmatprep.subr.bf16.mxu0 0
    %763 = vmatpush1.bf16.msra.mxu0 0
    %764 = vmatprep.subr.bf16.mxu0 0
    %765 = vmatpush1.bf16.msra.mxu0 0
    %766 = vmatprep.subr.bf16.mxu0 0
    %767 = vmatpush1.bf16.msra.mxu0 0
    %768 = vmatprep.subr.bf16.mxu0 0
    %769 = vmatpush1.bf16.msra.mxu0 0
    %770 = vmatprep.subr.bf16.mxu0 0
    %771 = vmatpush1.bf16.msra.mxu0 %v752
    %772 = vmatprep.subr.bf16.mxu0 0
    %773 = vmatpush1.bf16.msra.mxu0 %v751
    %774 = vmatprep.subr.bf16.mxu0 0
    %775 = vmatpush2.bf16.msra.mxu0 0
    %776 = vmatprep.subr.bf16.mxu0 0
    %777 = vmatpush2.bf16.msra.mxu0 0
    %778 = vmatprep.subr.bf16.mxu0 0
    %779 = vmatpush2.bf16.msra.mxu0 0
    %780 = vmatprep.subr.bf16.mxu0 0
    %781 = vmatpush2.bf16.msra.mxu0 0
    %782 = vmatprep.subr.bf16.mxu0 0
    %783 = vmatpush2.bf16.msra.mxu0 0
    %784 = vmatprep.subr.bf16.mxu0 0
    %785 = vmatpush2.bf16.msra.mxu0 0
    %786 = vmatprep.subr.bf16.mxu0 0
    %787 = vmatpush2.bf16.msra.mxu0 0
    %788 = vmatprep.subr.bf16.mxu0 0
    %789 = vmatpush2.bf16.msra.mxu0 0
    %790 = vmatprep.mubr.bf16.mxu0 0
    %791 = vmatmul.mubr.bf16.gmra.mxu0 %v756
    %v792 = vpop.f32.mrf.mxu0
    %v793 = vadd.f32 %v735, %v792
    %v794 = vpop.f32.mrf.mxu0
    %v795 = vpop.f32.mrf.mxu0
    %v796 = vpop.f32.mrf.mxu0
    %797 = vdwg.mxu0
    %v798 = vld [vmem:[%s9] sm:$0x1]
    %v800 = vlaneseq
    %v801 = vshrl.u32 %v800, 7
    %v802 = vsub.s32 0, %v801
    %v803 = vrot.slane %v798, %v802
    %v805 = vadd.f32 %v793, %v803
    %v806 = vxor.u32 %v805, 2147483648
    %v807 = vmul.f32 %v806, 1.442695
    %v808 = vpow.pop %v807
    %v809 = vadd.f32 %v808, 1.0
    %v810 = vrcp.pop %v809
    %v811 = vmul.f32 1.0, %v810
    %v812 = vtanh.pop %v805
    %814 = vrot.lane.b32.xlu0 %v675, 32
    %v815 = vpop.permute.xlu0 %814
    %v817 = vmul.f32 %v811, %v815
    %819 = vrot.lane.b32.xlu0 %v812, 64
    %v820 = vpop.permute.xlu0 %819
    %v822 = vmul.f32 %v811, %v820
    %824 = vrot.lane.b32.xlu0 %v822, 32
    %v825 = vpop.permute.xlu0 %824
    %v827 = vadd.f32 %v817, %v825
    %v828 = vtanh.pop %v827
    %830 = vrot.lane.b32.xlu0 %v828, 64
    %v831 = vpop.permute.xlu0 %830
    %v833 = vmul.f32 %v811, %v831
    %835 = vrot.lane.b32.xlu0 %v833, 32
    %v836 = vpop.permute.xlu0 %835
    %s838 = scalar_lea.vmem [#allocation12], 8
    %839 = vst.msk [vmem:[%s838] sm:$0xff] %vm526, %v836
    %841 = vrot.lane.b32.xlu0 %v827, 96
    %v842 = vpop.permute.xlu0 %841
    %s844 = scalar_lea.vmem [#allocation14], 8
    %845 = vst.msk [vmem:[%s844] sm:$0xff] %vm526, %v842
    %v846 = vpack.c.bf16 %v833, %v833
    %v847 = vld [vmem:[%s10] sm:$0xf]
    %v848 = vld [vmem:[%s10 + $0x4] sm:$0xf]
    %v849 = vld [vmem:[%s10 + $0x8] sm:$0xf]
    %v850 = vld [vmem:[%s10 + $0xc] sm:$0xf]
    %v851 = vld [vmem:[%s11] sm:$0x1]
    %v853 = vlaneseq
    %v854 = vshrl.u32 %v853, 7
    %v855 = vsub.s32 0, %v854
    %v856 = vrot.slane %v851, %v855
    %859 = vrot.lane.b32.xlu0 %v846, 32
    %v860 = vpop.permute.xlu0 %859
    %v865 = vunpack.c.l.b16 %v847
    %v866 = vunpack.c.l.b16 %v848
    %v867 = vunpack.c.l.b16 %v849
    %v868 = vunpack.c.l.b16 %v850
    %v869 = vpack.c.b16 %v866, %v865
    %v870 = vpack.c.b16 %v868, %v867
    %v874 = vsel %vm526, %v860, 0
    %876 = vmatprep.subr.bf16.mxu0 0
    %877 = vmatpush1.bf16.msra.mxu0 0
    %878 = vmatprep.subr.bf16.mxu0 0
    %879 = vmatpush1.bf16.msra.mxu0 0
    %880 = vmatprep.subr.bf16.mxu0 0
    %881 = vmatpush1.bf16.msra.mxu0 0
    %882 = vmatprep.subr.bf16.mxu0 0
    %883 = vmatpush1.bf16.msra.mxu0 0
    %884 = vmatprep.subr.bf16.mxu0 0
    %885 = vmatpush1.bf16.msra.mxu0 0
    %886 = vmatprep.subr.bf16.mxu0 0
    %887 = vmatpush1.bf16.msra.mxu0 0
    %888 = vmatprep.subr.bf16.mxu0 0
    %889 = vmatpush1.bf16.msra.mxu0 %v870
    %890 = vmatprep.subr.bf16.mxu0 0
    %891 = vmatpush1.bf16.msra.mxu0 %v869
    %892 = vmatprep.subr.bf16.mxu0 0
    %893 = vmatpush2.bf16.msra.mxu0 0
    %894 = vmatprep.subr.bf16.mxu0 0
    %895 = vmatpush2.bf16.msra.mxu0 0
    %896 = vmatprep.subr.bf16.mxu0 0
    %897 = vmatpush2.bf16.msra.mxu0 0
    %898 = vmatprep.subr.bf16.mxu0 0
    %899 = vmatpush2.bf16.msra.mxu0 0
    %900 = vmatprep.subr.bf16.mxu0 0
    %901 = vmatpush2.bf16.msra.mxu0 0
    %902 = vmatprep.subr.bf16.mxu0 0
    %903 = vmatpush2.bf16.msra.mxu0 0
    %904 = vmatprep.subr.bf16.mxu0 0
    %905 = vmatpush2.bf16.msra.mxu0 0
    %906 = vmatprep.subr.bf16.mxu0 0
    %907 = vmatpush2.bf16.msra.mxu0 0
    %908 = vmatprep.mubr.bf16.mxu0 0
    %909 = vmatmul.mubr.bf16.gmra.mxu0 %v874
    %v910 = vpop.f32.mrf.mxu0
    %v911 = vadd.f32 %v856, %v910
    %v912 = vpop.f32.mrf.mxu0
    %v913 = vpop.f32.mrf.mxu0
    %v914 = vpop.f32.mrf.mxu0
    %915 = vdwg.mxu0
    %916 = vst [vmem:[#allocation11] sm:$0xff] %v911
    // Predicated region
    $region298: #{decoder_forward.1} parent=1 // pred_check
      _
    $region299: #{decoder_forward.1} parent=1 // pred_check_branch
      %918 = sbr.rel (0) target = $region301
    $region300: #{decoder_forward.1} parent=1 // pred_region
      %s920 = ssub.s32 128, 128
      %921 = vsyncadd [#allocation6], %s920
      %s923 = sshll.u32 [#allocation11], 4
      %s924 = int_to_ptr.vmem [resolvable:$true] %s923
      %926 = dma.vmem_to_hbm [thread:$0]  %s924, 128, %s12, [#allocation6]
    $region301: #{decoder_forward.1} parent=1 // pred_fallthru
      _
    // Predicated region
    $region302: #{decoder_forward.1} parent=1 // pred_check
      _
    $region303: #{decoder_forward.1} parent=1 // pred_check_branch
      %928 = sbr.rel (0) target = $region305
    $region304: #{decoder_forward.1} parent=1 // pred_region
      %s930 = ssub.s32 256, 256
      %931 = vsyncadd [#allocation13], %s930
      %s932 = sshll.u32 [#allocation12], 4
      %s933 = int_to_ptr.vmem [resolvable:$true] %s932
      %938 = dma.vmem_to_hbm [thread:$0]  %s933, 256, %s13, [#allocation13], 128, 128, 8
    $region305: #{decoder_forward.1} parent=1 // pred_fallthru
      _
    // Predicated region
    $region306: #{decoder_forward.1} parent=1 // pred_check
      _
    $region307: #{decoder_forward.1} parent=1 // pred_check_branch
      %940 = sbr.rel (0) target = $region309
    $region308: #{decoder_forward.1} parent=1 // pred_region
      %s942 = ssub.s32 256, 256
      %943 = vsyncadd [#allocation13], %s942
      %s944 = sshll.u32 [#allocation14], 4
      %s945 = int_to_ptr.vmem [resolvable:$true] %s944
      %950 = dma.vmem_to_hbm [thread:$0]  %s945, 256, %s14, [#allocation13], 128, 128, 8
    $region309: #{decoder_forward.1} parent=1 // pred_fallthru
      _
    // Predicated region
    $region310: #{decoder_forward.1} parent=1 // pred_check
      _
    $region311: #{decoder_forward.1} parent=1 // pred_check_branch
      %952 = sbr.rel (0) target = $region313
    $region312: #{decoder_forward.1} parent=1 // pred_region
      %953 = dma.done [#allocation6], 128
    $region313: #{decoder_forward.1} parent=1 // pred_fallthru
      _
    // Predicated region
    $region314: #{decoder_forward.1} parent=1 // pred_check
      _
    $region315: #{decoder_forward.1} parent=1 // pred_check_branch
      %955 = sbr.rel (0) target = $region317
    $region316: #{decoder_forward.1} parent=1 // pred_region
      %956 = dma.done [#allocation13], 256
    $region317: #{decoder_forward.1} parent=1 // pred_fallthru
      _
    // Predicated region
    $region318: #{decoder_forward.1} parent=1 // pred_check
      _
    $region319: #{decoder_forward.1} parent=1 // pred_check_branch
      %958 = sbr.rel (0) target = $region321
    $region320: #{decoder_forward.1} parent=1 // pred_region
      %959 = dma.done [#allocation13], 256
    $region321: #{decoder_forward.1} parent=1 // pred_fallthru
      _
    %960 = vsyncpa [#allocation5], 1
    %961 = vsyncpa [#allocation10], 1
    %962 = vsyncpa [#allocation6], 1
    %963 = vsyncpa [#allocation13], 1
    %964 = vsyncpa [#allocation7], 1
  %965 = vsyncmov [#allocation3]
  %s966 = vpop.sfrf %965
  %p967 = scmp.eq.s32.totalorder %s966, 0
  %p968 = pneg %p967
  %970 = shalt.err (%p968)
  %s971 = scalar_lea.sflag [#allocation3], 1
  %972 = vsyncmov %s971
  %s973 = vpop.sfrf %972
  %p974 = scmp.eq.s32.totalorder %s973, 0
  %p975 = pneg %p974
  %977 = shalt.err (%p975)
  %s978 = scalar_lea.sflag [#allocation3], 2
  %979 = vsyncmov %s978
  %s980 = vpop.sfrf %979
  %p981 = scmp.eq.s32.totalorder %s980, 0
  %p982 = pneg %p981
  %984 = shalt.err (%p982)
  %s985 = scalar_lea.sflag [#allocation3], 3
  %986 = vsyncmov %s985
  %s987 = vpop.sfrf %986
  %p988 = scmp.eq.s32.totalorder %s987, 0
  %p989 = pneg %p988
  %991 = shalt.err (%p989)
  %s992 = scalar_lea.sflag [#allocation3], 4
  %993 = vsyncmov %s992
  %s994 = vpop.sfrf %993
  %p995 = scmp.eq.s32.totalorder %s994, 0
  %p996 = pneg %p995
  %998 = shalt.err (%p996)
  %s999 = scalar_lea.sflag [#allocation3], 5
  %1000 = vsyncmov %s999
  %s1001 = vpop.sfrf %1000
  %p1002 = scmp.eq.s32.totalorder %s1001, 0
  %p1003 = pneg %p1002
  %1005 = shalt.err (%p1003)
  %s1006 = scalar_lea.sflag [#allocation3], 6
  %1007 = vsyncmov %s1006
  %s1008 = vpop.sfrf %1007
  %p1009 = scmp.eq.s32.totalorder %s1008, 0
  %p1010 = pneg %p1009
  %1012 = shalt.err (%p1010)
  %s1013 = scalar_lea.sflag [#allocation3], 7
  %1014 = vsyncmov %s1013
  %s1015 = vpop.sfrf %1014
  %p1016 = scmp.eq.s32.totalorder %s1015, 0
  %p1017 = pneg %p1016
  %1019 = shalt.err (%p1017)

</llo_original>
